<compile_context>
chip_gen: v6e
topology: v6e:2x2x1
jax: 0.10.0
libtpu: 0.0.40
codegen_flags: <defaults>
</compile_context>

<pallas_src>
import functools

import numpy as np
import jax
import jax.numpy as jnp
from jax.experimental import pallas as pl
from jax.experimental.pallas import tpu as pltpu


_VMEM_LIMIT = 32 * 1024 * 1024   # explicit scoped-VMEM limit; safe on v5e/v6e/v7x
_COL_BUDGET = 12 * 1024 * 1024   # per-call working-set budget used to size column blocks


# ----------------------------------------------------------------------------
# Lane-dense column blocking: VMEM-budget-driven block width, even #steps >= 2
# when M is large enough (feeds v7x's two TensorCores), multiples of 128 only.
# ----------------------------------------------------------------------------
def _plan_columns(M, bytes_per_col, budget_bytes=_COL_BUDGET):
    """Return (padded_M, block_n) with block_n a multiple of 128."""
    cap = max(128, (budget_bytes // max(1, 2 * bytes_per_col)) // 128 * 128)
    min_steps = 2 if M >= 256 else 1
    steps = max(min_steps, -(-M // cap))          # cdiv
    if steps > 1 and steps % 2:                   # even step count for megacore balance
        steps += 1
    bn = ((-(-M // steps) + 127) // 128) * 128
    return bn * steps, bn


# ----------------------------------------------------------------------------
# HEAD kernel: PReLU(Conv3x3_pad1(PReLU(Conv1x1(x))))  -- 3x3 done in-kernel.
#
# Input is one zero-padded image, flattened:  xp (C, Mp), Mp = (H+3)*(W+2),
# image occupying padded coords rows 1..H, cols 1..W.  Because Conv1x1 has no
# bias and PReLU(0)=0, the padded border of t1 = PReLU(W1 @ xp) is still zero,
# so the 3x3 taps are plain shifted reads of the t1 scratch:
#     out[c, q=y*Wp+x] = sum_{kh,kw} W3[:,:,kh,kw] @ t1[:, q + kh*Wp + kw]
# valid for y<H, x<W (columns x in [W, W+2) of each row are garbage and get
# sliced off in XLA).  All reads stay inside Mp thanks to the extra bottom row.
# ----------------------------------------------------------------------------
def _head_kernel(x_ref, w1_ref, w3_ref, a_ref, o_ref, t1_ref, *, Wp, L):
    # x_ref : (1, C, Mp) bf16 | w1_ref: (C, C) bf16 | w3_ref: (9, C, C) bf16
    # a_ref : (1, 2) f32 SMEM (PReLU slopes after 1x1 / after 3x3)
    # o_ref : (1, C, L) bf16  | t1_ref: (C, Mp) bf16 VMEM scratch
    x = x_ref[0]
    t1 = jnp.dot(w1_ref[...], x, preferred_element_type=jnp.float32)
    a0 = a_ref[0, 0]
    t1 = jnp.where(t1 >= 0.0, t1, a0 * t1)            # PReLU epilogue in f32
    t1_ref[...] = t1.astype(jnp.bfloat16)

    acc = jnp.dot(w3_ref[0], t1_ref[:, pl.ds(0, L)],
                  preferred_element_type=jnp.float32)
    for k in range(1, 9):                              # static unroll: 9 tap matmuls
        kh, kw = divmod(k, 3)
        acc = acc + jnp.dot(w3_ref[k], t1_ref[:, pl.ds(kh * Wp + kw, L)],
                            preferred_element_type=jnp.float32)
    a1 = a_ref[0, 1]
    acc = jnp.where(acc >= 0.0, acc, a1 * acc)
    o_ref[0] = acc.astype(jnp.bfloat16)


def _head_call(xpf, w1m, w3t, alphas, H, W):
    B, C, Mp = xpf.shape
    Wp = W + 2
    L = H * Wp
    kernel = functools.partial(_head_kernel, Wp=Wp, L=L)
    flops = 2 * B * C * C * (Mp + 9 * L)
    bytes_acc = B * (C * Mp * 2 + C * L * 2) + 10 * C * C * 2
    return pl.pallas_call(
        kernel,
        out_shape=jax.ShapeDtypeStruct((B, C, L), jnp.bfloat16),
        grid=(B,),
        in_specs=[
            pl.BlockSpec((1, C, Mp), lambda b: (b, 0, 0)),
            pl.BlockSpec((C, C), lambda b: (0, 0)),
            pl.BlockSpec((9, C, C), lambda b: (0, 0, 0)),
            pl.BlockSpec((1, 2), lambda b: (0, 0),
                         memory_space=pltpu.MemorySpace.SMEM),
        ],
        out_specs=pl.BlockSpec((1, C, L), lambda b: (b, 0, 0)),
        scratch_shapes=[pltpu.VMEM((C, Mp), jnp.bfloat16)],
        compiler_params=pltpu.CompilerParams(
            dimension_semantics=("parallel",),
            vmem_limit_bytes=_VMEM_LIMIT),
        cost_estimate=pl.CostEstimate(flops=flops, transcendentals=0,
                                      bytes_accessed=bytes_acc),
    )(xpf, w1m, w3t, alphas)
    # TODO(synk): for large images, grid over (B, row tiles) with a 1-row halo so the
    # per-step (C, Mp) block stays within VMEM; per-image blocks suffice at these sizes.


# ----------------------------------------------------------------------------
# TAIL kernel: out = W_top4 @ PReLU(W_top3 @ xcol_top) + W_bot2 @ PReLU(W_bot1 @ xcol_bot)
# (both 2x2/s2 convs + PReLU, both final 1x1 convs, residual add) per column block.
# ----------------------------------------------------------------------------
def _tail_kernel(wt3_ref, wt4_ref, wb1_ref, wb2_ref, xt_ref, xb_ref, a_ref, o_ref):
    t3 = jnp.dot(wt3_ref[...], xt_ref[...], preferred_element_type=jnp.float32)
    at = a_ref[0, 0]
    t3 = jnp.where(t3 >= 0.0, t3, at * t3).astype(jnp.bfloat16)
    b1 = jnp.dot(wb1_ref[...], xb_ref[...], preferred_element_type=jnp.float32)
    ab = a_ref[0, 1]
    b1 = jnp.where(b1 >= 0.0, b1, ab * b1).astype(jnp.bfloat16)
    o_ref[...] = (jnp.dot(wt4_ref[...], t3, preferred_element_type=jnp.float32)
                  + jnp.dot(wb2_ref[...], b1, preferred_element_type=jnp.float32))


def _tail_call(wt3m, wt4m, wb1m, wb2m, xcol_top, xcol_bot, alphas):
    C4, M = xcol_top.shape
    C = C4 // 4
    C2 = 2 * C
    bytes_per_col = 2 * C4 * 2 + C2 * 4                 # bf16 ins + f32 out per column
    Mpad, bn = _plan_columns(M, bytes_per_col)
    if Mpad != M:
        xcol_top = jnp.pad(xcol_top, ((0, 0), (0, Mpad - M)))
        xcol_bot = jnp.pad(xcol_bot, ((0, 0), (0, Mpad - M)))
    flops = 2 * Mpad * (2 * C4 * C + 2 * C * C2)
    bytes_acc = Mpad * bytes_per_col + (2 * C * C4 + 2 * C2 * C) * 2
    out = pl.pallas_call(
        _tail_kernel,
        out_shape=jax.ShapeDtypeStruct((C2, Mpad), jnp.float32),
        grid=(Mpad // bn,),
        in_specs=[
            pl.BlockSpec((C, C4), lambda j: (0, 0)),
            pl.BlockSpec((C2, C), lambda j: (0, 0)),
            pl.BlockSpec((C, C4), lambda j: (0, 0)),
            pl.BlockSpec((C2, C), lambda j: (0, 0)),
            pl.BlockSpec((C4, bn), lambda j: (0, j)),
            pl.BlockSpec((C4, bn), lambda j: (0, j)),
            pl.BlockSpec((1, 2), lambda j: (0, 0),
                         memory_space=pltpu.MemorySpace.SMEM),
        ],
        out_specs=pl.BlockSpec((C2, bn), lambda j: (0, j)),
        compiler_params=pltpu.CompilerParams(
            dimension_semantics=("parallel",),
            vmem_limit_bytes=_VMEM_LIMIT),
        cost_estimate=pl.CostEstimate(flops=flops, transcendentals=0,
                                      bytes_accessed=bytes_acc),
    )(wt3m, wt4m, wb1m, wb2m, xcol_top, xcol_bot, alphas)
    return out[:, :M] if Mpad != M else out


# ----------------------------------------------------------------------------
# XLA glue: 2x2/stride-2 im2col (kernel==stride -> gather, no duplication).
# Rows ordered (cin, kh, kw) to match the OIHW weight reshape; columns (b, y, x).
# ----------------------------------------------------------------------------
def _im2col_2x2_s2(x):
    B, C, H, W = x.shape
    Ho, Wo = H // 2, W // 2
    x6 = x.reshape(B, C, Ho, 2, Wo, 2)
    return jnp.transpose(x6, (1, 3, 5, 0, 2, 4)).reshape(C * 4, B * Ho * Wo)


# ----------------------------------------------------------------------------
# ResidualDownSample forward
# ----------------------------------------------------------------------------
def residual_downsample_fwd(p, x):
    """x: (B, C, H, W) float32 -> (B, 2C, H//2, W//2) float32."""
    B, C, H, W = x.shape
    Ho, Wo = H // 2, W // 2
    Wp = W + 2

    xb = x.astype(jnp.bfloat16)                                   # bf16 activation stream

    # ---- head: Conv1x1 + PReLU + Conv3x3(p=1) + PReLU (in-kernel 3x3, no im2col slab)
    xp = jnp.pad(xb, ((0, 0), (0, 0), (1, 2), (1, 1)))            # (B, C, H+3, W+2)
    xpf = xp.reshape(B, C, (H + 3) * Wp)
    w1m = p["top_w"][0].reshape(C, C).astype(jnp.bfloat16)
    w3t = jnp.transpose(p["top_w"][1], (2, 3, 0, 1)).reshape(9, C, C).astype(jnp.bfloat16)
    head_alphas = jnp.concatenate([p["top_a"][0], p["top_a"][1]], axis=1)   # (1, 2) f32
    t2q = _head_call(xpf, w1m, w3t, head_alphas, H, W)            # (B, C, H*Wp) bf16
    t2 = t2q.reshape(B, C, H, Wp)[:, :, :, :W]                    # drop garbage columns

    # ---- tail: both 2x2/s2 + PReLU convs, both final 1x1 convs, residual add (fused)
    xcol_top = _im2col_2x2_s2(t2)                                 # (4C, B*Ho*Wo) bf16
    xcol_bot = _im2col_2x2_s2(xb)
    wt3m = p["top_w"][2].reshape(C, 4 * C).astype(jnp.bfloat16)
    wt4m = p["top_w"][3].reshape(2 * C, C).astype(jnp.bfloat16)
    wb1m = p["bot_w"][0].reshape(C, 4 * C).astype(jnp.bfloat16)
    wb2m = p["bot_w"][1].reshape(2 * C, C).astype(jnp.bfloat16)
    tail_alphas = jnp.concatenate([p["top_a"][2], p["bot_a"][0]], axis=1)   # (1, 2) f32
    out = _tail_call(wt3m, wt4m, wb1m, wb2m, xcol_top, xcol_bot, tail_alphas)

    return jnp.transpose(out.reshape(2 * C, B, Ho, Wo), (1, 0, 2, 3))


# ----------------------------------------------------------------------------
# Deterministic parameter init (bias=False, the module default).
# TODO(synk): bias=True variant of the module is not wired.
# ----------------------------------------------------------------------------
def init_params(key, in_channels):
    C = in_channels
    shapes_top = [(C, C, 1, 1), (C, C, 3, 3), (C, C, 2, 2), (2 * C, C, 1, 1)]
    shapes_bot = [(C, C, 2, 2), (2 * C, C, 1, 1)]
    ks = jax.random.split(key, len(shapes_top) + len(shapes_bot))

    def mkw(k, s):
        fan_in = s[1] * s[2] * s[3]
        return (jax.random.normal(k, s, jnp.float32) / np.sqrt(fan_in)).astype(jnp.float32)

    def alpha():  # nn.PReLU() default init
        return jnp.full((1, 1), 0.25, jnp.float32)

    return {
        "top_w": [mkw(ks[i], s) for i, s in enumerate(shapes_top)],
        "bot_w": [mkw(ks[len(shapes_top) + i], s) for i, s in enumerate(shapes_bot)],
        "top_a": [alpha(), alpha(), alpha()],
        "bot_a": [alpha()],
    }


# ----------------------------------------------------------------------------
# Pure-JAX reference (for correctness check)
# ----------------------------------------------------------------------------
def _conv_ref(x, w, stride=1, pad=0):
    return jax.lax.conv_general_dilated(
        x, w, window_strides=(stride, stride),
        padding=[(pad, pad), (pad, pad)],
        dimension_numbers=("NCHW", "OIHW", "NCHW"),
        precision=jax.lax.Precision.HIGHEST)


def _prelu_ref(x, a):
    return jnp.where(x >= 0.0, x, a[0, 0] * x)


def residual_downsample_ref(p, x):
    t = _prelu_ref(_conv_ref(x, p["top_w"][0]), p["top_a"][0])
    t = _prelu_ref(_conv_ref(t, p["top_w"][1], pad=1), p["top_a"][1])
    t = _prelu_ref(_conv_ref(t, p["top_w"][2], stride=2), p["top_a"][2])
    t = _conv_ref(t, p["top_w"][3])
    b = _prelu_ref(_conv_ref(x, p["bot_w"][0], stride=2), p["bot_a"][0])
    b = _conv_ref(b, p["bot_w"][1])
    return t + b


if __name__ == "__main__":
    B, C, H, W = 2, 8, 16, 16
    kp, kx = jax.random.split(jax.random.PRNGKey(0))
    params = init_params(kp, C)
    x = jax.random.normal(kx, (B, C, H, W), dtype=jnp.float32)

    fwd = jax.jit(residual_downsample_fwd)
    out = jax.block_until_ready(fwd(params, x))

    assert out.shape == (B, 2 * C, H // 2, W // 2), out.shape
    assert bool(jnp.all(jnp.isfinite(out)))

    ref = residual_downsample_ref(params, x)
    # bf16 activation/weight streams with f32 accumulation -> relaxed tolerance
    err = jnp.abs(out - ref)
    tol = 5e-2 + 5e-2 * jnp.abs(ref)
    assert bool(jnp.all(err <= tol)), (
        f"mismatch vs reference: max_abs_err={float(jnp.max(err))}")

    print("KERNEL_OK")
</pallas_src>

<mosaic_0001>
module attributes {stable_mosaic.version = 11 : i64} {
  func.func @_head_kernel(%arg0: i32, %arg1: memref<1x8x342xbf16, #tpu.memory_space<vmem>>, %arg2: memref<8x8xbf16, #tpu.memory_space<vmem>>, %arg3: memref<9x8x8xbf16, #tpu.memory_space<vmem>>, %arg4: memref<1x2xf32, #tpu.memory_space<smem>>, %arg5: memref<1x8x288xbf16, #tpu.memory_space<vmem>>, %arg6: memref<8x342xbf16, #tpu.memory_space<vmem>>) attributes {dimension_semantics = [#tpu.dimension_semantics<parallel>], iteration_bounds = array<i64: 2>, scalar_prefetch = 0 : i64, scratch_operands = 1 : i64, tpu.core_type = #tpu.core_type<tc>, window_params = [{transform_indices = @transform_0, window_bounds = array<i64: 1, 8, 342>}, {pipeline_mode = #tpu.pipeline_mode<synchronous>, transform_indices = @transform_1, window_bounds = array<i64: 8, 8>}, {pipeline_mode = #tpu.pipeline_mode<synchronous>, transform_indices = @transform_2, window_bounds = array<i64: 9, 8, 8>}, {transform_indices = @transform_3, window_bounds = array<i64: 1, 2>}, {transform_indices = @transform_4, window_bounds = array<i64: 1, 8, 288>}]} {
    %c0 = arith.constant 0 : index
    %c0_0 = arith.constant 0 : index
    %c0_1 = arith.constant 0 : index
    %0 = vector.load %arg1[%c0, %c0_0, %c0_1] : memref<1x8x342xbf16, #tpu.memory_space<vmem>>, vector<1x8x342xbf16>
    %1 = vector.shape_cast %0 : vector<1x8x342xbf16> to vector<8x342xbf16>
    %c0_2 = arith.constant 0 : index
    %c0_3 = arith.constant 0 : index
    %2 = vector.load %arg2[%c0_2, %c0_3] : memref<8x8xbf16, #tpu.memory_space<vmem>>, vector<8x8xbf16>
    %cst = arith.constant dense<0.000000e+00> : vector<8x342xf32>
    %3 = tpu.matmul %2, %1, %cst {dimension_numbers = #tpu.dot_dimension_numbers<[1], [0], [0], [1], [0, 0, 1, 1], [], []>} : vector<8x8xbf16>, vector<8x342xbf16>, vector<8x342xf32> -> vector<8x342xf32>
    %c0_4 = arith.constant 0 : index
    %c0_5 = arith.constant 0 : index
    %4 = memref.load %arg4[%c0_4, %c0_5] : memref<1x2xf32, #tpu.memory_space<smem>>
    %cst_6 = arith.constant 0.000000e+00 : f32
    %5 = vector.broadcast %cst_6 : f32 to vector<8x342xf32>
    %6 = arith.cmpf oge, %3, %5 : vector<8x342xf32>
    %7 = vector.broadcast %4 : f32 to vector<8x342xf32>
    %8 = arith.mulf %7, %3 : vector<8x342xf32>
    %9 = arith.select %6, %3, %8 : vector<8x342xi1>, vector<8x342xf32>
    %10 = arith.truncf %9 : vector<8x342xf32> to vector<8x342xbf16>
    %c0_7 = arith.constant 0 : index
    %c0_8 = arith.constant 0 : index
    %11 = vector.load %arg6[%c0_7, %c0_8] : memref<8x342xbf16, #tpu.memory_space<vmem>>, vector<8x342xbf16>
    tpu.vector_store %arg6[%c0_7, %c0_8], %10 {strides = array<i32>} : memref<8x342xbf16, #tpu.memory_space<vmem>>, vector<8x342xbf16>,
    %c0_9 = arith.constant 0 : index
    %c0_10 = arith.constant 0 : index
    %c0_11 = arith.constant 0 : index
    %12 = vector.load %arg3[%c0_9, %c0_10, %c0_11] : memref<9x8x8xbf16, #tpu.memory_space<vmem>>, vector<1x8x8xbf16>
    %13 = vector.shape_cast %12 : vector<1x8x8xbf16> to vector<8x8xbf16>
    %c0_12 = arith.constant 0 : index
    %c0_13 = arith.constant 0 : index
    %14 = vector.load %arg6[%c0_12, %c0_13] : memref<8x342xbf16, #tpu.memory_space<vmem>>, vector<8x288xbf16>
    %cst_14 = arith.constant dense<0.000000e+00> : vector<8x288xf32>
    %15 = tpu.matmul %13, %14, %cst_14 {dimension_numbers = #tpu.dot_dimension_numbers<[1], [0], [0], [1], [0, 0, 1, 1], [], []>} : vector<8x8xbf16>, vector<8x288xbf16>, vector<8x288xf32> -> vector<8x288xf32>
    %c1 = arith.constant 1 : index
    %c0_15 = arith.constant 0 : index
    %c0_16 = arith.constant 0 : index
    %16 = vector.load %arg3[%c1, %c0_15, %c0_16] : memref<9x8x8xbf16, #tpu.memory_space<vmem>>, vector<1x8x8xbf16>
    %17 = vector.shape_cast %16 : vector<1x8x8xbf16> to vector<8x8xbf16>
    %c0_17 = arith.constant 0 : index
    %c1_18 = arith.constant 1 : index
    %18 = vector.load %arg6[%c0_17, %c1_18] : memref<8x342xbf16, #tpu.memory_space<vmem>>, vector<8x288xbf16>
    %cst_19 = arith.constant dense<0.000000e+00> : vector<8x288xf32>
    %19 = tpu.matmul %17, %18, %cst_19 {dimension_numbers = #tpu.dot_dimension_numbers<[1], [0], [0], [1], [0, 0, 1, 1], [], []>} : vector<8x8xbf16>, vector<8x288xbf16>, vector<8x288xf32> -> vector<8x288xf32>
    %20 = arith.addf %15, %19 : vector<8x288xf32>
    %c2 = arith.constant 2 : index
    %c0_20 = arith.constant 0 : index
    %c0_21 = arith.constant 0 : index
    %21 = vector.load %arg3[%c2, %c0_20, %c0_21] : memref<9x8x8xbf16, #tpu.memory_space<vmem>>, vector<1x8x8xbf16>
    %22 = vector.shape_cast %21 : vector<1x8x8xbf16> to vector<8x8xbf16>
    %c0_22 = arith.constant 0 : index
    %c2_23 = arith.constant 2 : index
    %23 = vector.load %arg6[%c0_22, %c2_23] : memref<8x342xbf16, #tpu.memory_space<vmem>>, vector<8x288xbf16>
    %cst_24 = arith.constant dense<0.000000e+00> : vector<8x288xf32>
    %24 = tpu.matmul %22, %23, %cst_24 {dimension_numbers = #tpu.dot_dimension_numbers<[1], [0], [0], [1], [0, 0, 1, 1], [], []>} : vector<8x8xbf16>, vector<8x288xbf16>, vector<8x288xf32> -> vector<8x288xf32>
    %25 = arith.addf %20, %24 : vector<8x288xf32>
    %c3 = arith.constant 3 : index
    %c0_25 = arith.constant 0 : index
    %c0_26 = arith.constant 0 : index
    %26 = vector.load %arg3[%c3, %c0_25, %c0_26] : memref<9x8x8xbf16, #tpu.memory_space<vmem>>, vector<1x8x8xbf16>
    %27 = vector.shape_cast %26 : vector<1x8x8xbf16> to vector<8x8xbf16>
    %c0_27 = arith.constant 0 : index
    %c18 = arith.constant 18 : index
    %28 = vector.load %arg6[%c0_27, %c18] : memref<8x342xbf16, #tpu.memory_space<vmem>>, vector<8x288xbf16>
    %cst_28 = arith.constant dense<0.000000e+00> : vector<8x288xf32>
    %29 = tpu.matmul %27, %28, %cst_28 {dimension_numbers = #tpu.dot_dimension_numbers<[1], [0], [0], [1], [0, 0, 1, 1], [], []>} : vector<8x8xbf16>, vector<8x288xbf16>, vector<8x288xf32> -> vector<8x288xf32>
    %30 = arith.addf %25, %29 : vector<8x288xf32>
    %c4 = arith.constant 4 : index
    %c0_29 = arith.constant 0 : index
    %c0_30 = arith.constant 0 : index
    %31 = vector.load %arg3[%c4, %c0_29, %c0_30] : memref<9x8x8xbf16, #tpu.memory_space<vmem>>, vector<1x8x8xbf16>
    %32 = vector.shape_cast %31 : vector<1x8x8xbf16> to vector<8x8xbf16>
    %c0_31 = arith.constant 0 : index
    %c19 = arith.constant 19 : index
    %33 = vector.load %arg6[%c0_31, %c19] : memref<8x342xbf16, #tpu.memory_space<vmem>>, vector<8x288xbf16>
    %cst_32 = arith.constant dense<0.000000e+00> : vector<8x288xf32>
    %34 = tpu.matmul %32, %33, %cst_32 {dimension_numbers = #tpu.dot_dimension_numbers<[1], [0], [0], [1], [0, 0, 1, 1], [], []>} : vector<8x8xbf16>, vector<8x288xbf16>, vector<8x288xf32> -> vector<8x288xf32>
    %35 = arith.addf %30, %34 : vector<8x288xf32>
    %c5 = arith.constant 5 : index
    %c0_33 = arith.constant 0 : index
    %c0_34 = arith.constant 0 : index
    %36 = vector.load %arg3[%c5, %c0_33, %c0_34] : memref<9x8x8xbf16, #tpu.memory_space<vmem>>, vector<1x8x8xbf16>
    %37 = vector.shape_cast %36 : vector<1x8x8xbf16> to vector<8x8xbf16>
    %c0_35 = arith.constant 0 : index
    %c20 = arith.constant 20 : index
    %38 = vector.load %arg6[%c0_35, %c20] : memref<8x342xbf16, #tpu.memory_space<vmem>>, vector<8x288xbf16>
    %cst_36 = arith.constant dense<0.000000e+00> : vector<8x288xf32>
    %39 = tpu.matmul %37, %38, %cst_36 {dimension_numbers = #tpu.dot_dimension_numbers<[1], [0], [0], [1], [0, 0, 1, 1], [], []>} : vector<8x8xbf16>, vector<8x288xbf16>, vector<8x288xf32> -> vector<8x288xf32>
    %40 = arith.addf %35, %39 : vector<8x288xf32>
    %c6 = arith.constant 6 : index
    %c0_37 = arith.constant 0 : index
    %c0_38 = arith.constant 0 : index
    %41 = vector.load %arg3[%c6, %c0_37, %c0_38] : memref<9x8x8xbf16, #tpu.memory_space<vmem>>, vector<1x8x8xbf16>
    %42 = vector.shape_cast %41 : vector<1x8x8xbf16> to vector<8x8xbf16>
    %c0_39 = arith.constant 0 : index
    %c36 = arith.constant 36 : index
    %43 = vector.load %arg6[%c0_39, %c36] : memref<8x342xbf16, #tpu.memory_space<vmem>>, vector<8x288xbf16>
    %cst_40 = arith.constant dense<0.000000e+00> : vector<8x288xf32>
    %44 = tpu.matmul %42, %43, %cst_40 {dimension_numbers = #tpu.dot_dimension_numbers<[1], [0], [0], [1], [0, 0, 1, 1], [], []>} : vector<8x8xbf16>, vector<8x288xbf16>, vector<8x288xf32> -> vector<8x288xf32>
    %45 = arith.addf %40, %44 : vector<8x288xf32>
    %c7 = arith.constant 7 : index
    %c0_41 = arith.constant 0 : index
    %c0_42 = arith.constant 0 : index
    %46 = vector.load %arg3[%c7, %c0_41, %c0_42] : memref<9x8x8xbf16, #tpu.memory_space<vmem>>, vector<1x8x8xbf16>
    %47 = vector.shape_cast %46 : vector<1x8x8xbf16> to vector<8x8xbf16>
    %c0_43 = arith.constant 0 : index
    %c37 = arith.constant 37 : index
    %48 = vector.load %arg6[%c0_43, %c37] : memref<8x342xbf16, #tpu.memory_space<vmem>>, vector<8x288xbf16>
    %cst_44 = arith.constant dense<0.000000e+00> : vector<8x288xf32>
    %49 = tpu.matmul %47, %48, %cst_44 {dimension_numbers = #tpu.dot_dimension_numbers<[1], [0], [0], [1], [0, 0, 1, 1], [], []>} : vector<8x8xbf16>, vector<8x288xbf16>, vector<8x288xf32> -> vector<8x288xf32>
    %50 = arith.addf %45, %49 : vector<8x288xf32>
    %c8 = arith.constant 8 : index
    %c0_45 = arith.constant 0 : index
    %c0_46 = arith.constant 0 : index
    %51 = vector.load %arg3[%c8, %c0_45, %c0_46] : memref<9x8x8xbf16, #tpu.memory_space<vmem>>, vector<1x8x8xbf16>
    %52 = vector.shape_cast %51 : vector<1x8x8xbf16> to vector<8x8xbf16>
    %c0_47 = arith.constant 0 : index
    %c38 = arith.constant 38 : index
    %53 = vector.load %arg6[%c0_47, %c38] : memref<8x342xbf16, #tpu.memory_space<vmem>>, vector<8x288xbf16>
    %cst_48 = arith.constant dense<0.000000e+00> : vector<8x288xf32>
    %54 = tpu.matmul %52, %53, %cst_48 {dimension_numbers = #tpu.dot_dimension_numbers<[1], [0], [0], [1], [0, 0, 1, 1], [], []>} : vector<8x8xbf16>, vector<8x288xbf16>, vector<8x288xf32> -> vector<8x288xf32>
    %55 = arith.addf %50, %54 : vector<8x288xf32>
    %c0_49 = arith.constant 0 : index
    %c1_50 = arith.constant 1 : index
    %56 = memref.load %arg4[%c0_49, %c1_50] : memref<1x2xf32, #tpu.memory_space<smem>>
    %cst_51 = arith.constant 0.000000e+00 : f32
    %57 = vector.broadcast %cst_51 : f32 to vector<8x288xf32>
    %58 = arith.cmpf oge, %55, %57 : vector<8x288xf32>
    %59 = vector.broadcast %56 : f32 to vector<8x288xf32>
    %60 = arith.mulf %59, %55 : vector<8x288xf32>
    %61 = arith.select %58, %55, %60 : vector<8x288xi1>, vector<8x288xf32>
    %62 = arith.truncf %61 : vector<8x288xf32> to vector<8x288xbf16>
    %c0_52 = arith.constant 0 : index
    %c0_53 = arith.constant 0 : index
    %c0_54 = arith.constant 0 : index
    %63 = vector.load %arg5[%c0_52, %c0_53, %c0_54] : memref<1x8x288xbf16, #tpu.memory_space<vmem>>, vector<1x8x288xbf16>
    %64 = vector.shape_cast %63 : vector<1x8x288xbf16> to vector<8x288xbf16>
    %65 = vector.shape_cast %62 : vector<8x288xbf16> to vector<1x8x288xbf16>
    tpu.vector_store %arg5[%c0_52, %c0_53, %c0_54], %65 {strides = array<i32>} : memref<1x8x288xbf16, #tpu.memory_space<vmem>>, vector<1x8x288xbf16>,
    return
  }
  func.func @transform_0(%arg0: i32) -> (i32, i32, i32) {
    %c0_i32 = arith.constant 0 : i32
    %c0_i32_0 = arith.constant 0 : i32
    %c0_i32_1 = arith.constant 0 : i32
    return %arg0, %c0_i32, %c0_i32_0 : i32, i32, i32
  }
  func.func @transform_1(%arg0: i32) -> (i32, i32) {
    %c0_i32 = arith.constant 0 : i32
    %c0_i32_0 = arith.constant 0 : i32
    %c0_i32_1 = arith.constant 0 : i32
    return %c0_i32, %c0_i32_0 : i32, i32
  }
  func.func @transform_2(%arg0: i32) -> (i32, i32, i32) {
    %c0_i32 = arith.constant 0 : i32
    %c0_i32_0 = arith.constant 0 : i32
    %c0_i32_1 = arith.constant 0 : i32
    %c0_i32_2 = arith.constant 0 : i32
    return %c0_i32, %c0_i32_0, %c0_i32_1 : i32, i32, i32
  }
  func.func @transform_3(%arg0: i32) -> (i32, i32) {
    %c0_i32 = arith.constant 0 : i32
    %c0_i32_0 = arith.constant 0 : i32
    %c0_i32_1 = arith.constant 0 : i32
    return %c0_i32, %c0_i32_0 : i32, i32
  }
  func.func @transform_4(%arg0: i32) -> (i32, i32, i32) {
    %c0_i32 = arith.constant 0 : i32
    %c0_i32_0 = arith.constant 0 : i32
    %c0_i32_1 = arith.constant 0 : i32
    return %arg0, %c0_i32, %c0_i32_0 : i32, i32, i32
  }
}

module attributes {stable_mosaic.version = 11 : i64} {
  func.func @_tail_kernel(%arg0: i32, %arg1: memref<8x32xbf16, #tpu.memory_space<vmem>>, %arg2: memref<16x8xbf16, #tpu.memory_space<vmem>>, %arg3: memref<8x32xbf16, #tpu.memory_space<vmem>>, %arg4: memref<16x8xbf16, #tpu.memory_space<vmem>>, %arg5: memref<32x128xbf16, #tpu.memory_space<vmem>>, %arg6: memref<32x128xbf16, #tpu.memory_space<vmem>>, %arg7: memref<1x2xf32, #tpu.memory_space<smem>>, %arg8: memref<16x128xf32, #tpu.memory_space<vmem>>) attributes {dimension_semantics = [#tpu.dimension_semantics<parallel>], iteration_bounds = array<i64: 1>, scalar_prefetch = 0 : i64, scratch_operands = 0 : i64, tpu.core_type = #tpu.core_type<tc>, window_params = [{pipeline_mode = #tpu.pipeline_mode<synchronous>, transform_indices = @transform_0, window_bounds = array<i64: 8, 32>}, {pipeline_mode = #tpu.pipeline_mode<synchronous>, transform_indices = @transform_1, window_bounds = array<i64: 16, 8>}, {pipeline_mode = #tpu.pipeline_mode<synchronous>, transform_indices = @transform_2, window_bounds = array<i64: 8, 32>}, {pipeline_mode = #tpu.pipeline_mode<synchronous>, transform_indices = @transform_3, window_bounds = array<i64: 16, 8>}, {transform_indices = @transform_4, window_bounds = array<i64: 32, 128>}, {transform_indices = @transform_5, window_bounds = array<i64: 32, 128>}, {transform_indices = @transform_6, window_bounds = array<i64: 1, 2>}, {transform_indices = @transform_7, window_bounds = array<i64: 16, 128>}]} {
    %c0 = arith.constant 0 : index
    %c0_0 = arith.constant 0 : index
    %0 = vector.load %arg1[%c0, %c0_0] : memref<8x32xbf16, #tpu.memory_space<vmem>>, vector<8x32xbf16>
    %c0_1 = arith.constant 0 : index
    %c0_2 = arith.constant 0 : index
    %1 = vector.load %arg5[%c0_1, %c0_2] : memref<32x128xbf16, #tpu.memory_space<vmem>>, vector<32x128xbf16>
    %cst = arith.constant dense<0.000000e+00> : vector<8x128xf32>
    %2 = tpu.matmul %0, %1, %cst {dimension_numbers = #tpu.dot_dimension_numbers<[1], [0], [0], [1], [0, 0, 1, 1], [], []>} : vector<8x32xbf16>, vector<32x128xbf16>, vector<8x128xf32> -> vector<8x128xf32>
    %c0_3 = arith.constant 0 : index
    %c0_4 = arith.constant 0 : index
    %3 = memref.load %arg7[%c0_3, %c0_4] : memref<1x2xf32, #tpu.memory_space<smem>>
    %cst_5 = arith.constant 0.000000e+00 : f32
    %4 = vector.broadcast %cst_5 : f32 to vector<8x128xf32>
    %5 = arith.cmpf oge, %2, %4 : vector<8x128xf32>
    %6 = vector.broadcast %3 : f32 to vector<8x128xf32>
    %7 = arith.mulf %6, %2 : vector<8x128xf32>
    %8 = arith.select %5, %2, %7 : vector<8x128xi1>, vector<8x128xf32>
    %9 = arith.truncf %8 : vector<8x128xf32> to vector<8x128xbf16>
    %c0_6 = arith.constant 0 : index
    %c0_7 = arith.constant 0 : index
    %10 = vector.load %arg3[%c0_6, %c0_7] : memref<8x32xbf16, #tpu.memory_space<vmem>>, vector<8x32xbf16>
    %c0_8 = arith.constant 0 : index
    %c0_9 = arith.constant 0 : index
    %11 = vector.load %arg6[%c0_8, %c0_9] : memref<32x128xbf16, #tpu.memory_space<vmem>>, vector<32x128xbf16>
    %cst_10 = arith.constant dense<0.000000e+00> : vector<8x128xf32>
    %12 = tpu.matmul %10, %11, %cst_10 {dimension_numbers = #tpu.dot_dimension_numbers<[1], [0], [0], [1], [0, 0, 1, 1], [], []>} : vector<8x32xbf16>, vector<32x128xbf16>, vector<8x128xf32> -> vector<8x128xf32>
    %c0_11 = arith.constant 0 : index
    %c1 = arith.constant 1 : index
    %13 = memref.load %arg7[%c0_11, %c1] : memref<1x2xf32, #tpu.memory_space<smem>>
    %cst_12 = arith.constant 0.000000e+00 : f32
    %14 = vector.broadcast %cst_12 : f32 to vector<8x128xf32>
    %15 = arith.cmpf oge, %12, %14 : vector<8x128xf32>
    %16 = vector.broadcast %13 : f32 to vector<8x128xf32>
    %17 = arith.mulf %16, %12 : vector<8x128xf32>
    %18 = arith.select %15, %12, %17 : vector<8x128xi1>, vector<8x128xf32>
    %19 = arith.truncf %18 : vector<8x128xf32> to vector<8x128xbf16>
    %c0_13 = arith.constant 0 : index
    %c0_14 = arith.constant 0 : index
    %20 = vector.load %arg2[%c0_13, %c0_14] : memref<16x8xbf16, #tpu.memory_space<vmem>>, vector<16x8xbf16>
    %cst_15 = arith.constant dense<0.000000e+00> : vector<16x128xf32>
    %21 = tpu.matmul %20, %9, %cst_15 {dimension_numbers = #tpu.dot_dimension_numbers<[1], [0], [0], [1], [0, 0, 1, 1], [], []>} : vector<16x8xbf16>, vector<8x128xbf16>, vector<16x128xf32> -> vector<16x128xf32>
    %c0_16 = arith.constant 0 : index
    %c0_17 = arith.constant 0 : index
    %22 = vector.load %arg4[%c0_16, %c0_17] : memref<16x8xbf16, #tpu.memory_space<vmem>>, vector<16x8xbf16>
    %cst_18 = arith.constant dense<0.000000e+00> : vector<16x128xf32>
    %23 = tpu.matmul %22, %19, %cst_18 {dimension_numbers = #tpu.dot_dimension_numbers<[1], [0], [0], [1], [0, 0, 1, 1], [], []>} : vector<16x8xbf16>, vector<8x128xbf16>, vector<16x128xf32> -> vector<16x128xf32>
    %24 = arith.addf %21, %23 : vector<16x128xf32>
    %c0_19 = arith.constant 0 : index
    %c0_20 = arith.constant 0 : index
    %25 = vector.load %arg8[%c0_19, %c0_20] : memref<16x128xf32, #tpu.memory_space<vmem>>, vector<16x128xf32>
    tpu.vector_store %arg8[%c0_19, %c0_20], %24 {strides = array<i32>} : memref<16x128xf32, #tpu.memory_space<vmem>>, vector<16x128xf32>,
    return
  }
  func.func @transform_0(%arg0: i32) -> (i32, i32) {
    %c0_i32 = arith.constant 0 : i32
    %c0_i32_0 = arith.constant 0 : i32
    %c0_i32_1 = arith.constant 0 : i32
    return %c0_i32, %c0_i32_0 : i32, i32
  }
  func.func @transform_1(%arg0: i32) -> (i32, i32) {
    %c0_i32 = arith.constant 0 : i32
    %c0_i32_0 = arith.constant 0 : i32
    %c0_i32_1 = arith.constant 0 : i32
    return %c0_i32, %c0_i32_0 : i32, i32
  }
  func.func @transform_2(%arg0: i32) -> (i32, i32) {
    %c0_i32 = arith.constant 0 : i32
    %c0_i32_0 = arith.constant 0 : i32
    %c0_i32_1 = arith.constant 0 : i32
    return %c0_i32, %c0_i32_0 : i32, i32
  }
  func.func @transform_3(%arg0: i32) -> (i32, i32) {
    %c0_i32 = arith.constant 0 : i32
    %c0_i32_0 = arith.constant 0 : i32
    %c0_i32_1 = arith.constant 0 : i32
    return %c0_i32, %c0_i32_0 : i32, i32
  }
  func.func @transform_4(%arg0: i32) -> (i32, i32) {
    %c0_i32 = arith.constant 0 : i32
    %c0_i32_0 = arith.constant 0 : i32
    return %c0_i32, %arg0 : i32, i32
  }
  func.func @transform_5(%arg0: i32) -> (i32, i32) {
    %c0_i32 = arith.constant 0 : i32
    %c0_i32_0 = arith.constant 0 : i32
    return %c0_i32, %arg0 : i32, i32
  }
  func.func @transform_6(%arg0: i32) -> (i32, i32) {
    %c0_i32 = arith.constant 0 : i32
    %c0_i32_0 = arith.constant 0 : i32
    %c0_i32_1 = arith.constant 0 : i32
    return %c0_i32, %c0_i32_0 : i32, i32
  }
  func.func @transform_7(%arg0: i32) -> (i32, i32) {
    %c0_i32 = arith.constant 0 : i32
    %c0_i32_0 = arith.constant 0 : i32
    return %c0_i32, %arg0 : i32, i32
  }
}

</mosaic_0001>

<llo_original>
// kernel: residual_downsample_fwd.2
$region0: #{residual_downsample_fwd.2}
  #allocation0 [shape = 'u32[]', space=smem, size = 0x4, offset = 0x4, fixed_abs, tag = 'smem constant byte address 0x4 - core index']
  #allocation1 [shape = 'u32[144,128]{1,0:T(1,128)}', space=vmem, size = 0x12000, scoped, tag = 'internal scratch']
  #allocation2 [shape = 'bf16[8,342]{1,0:T(8,128)(2,1)}', space=vmem, size = 0x1800, scoped, tag = 'scratch operand']
  %s0 = inlined_call_operand.vmem [shape: bf16[2,8,342], index: 0, kind: input, shape index: {}]
  %s1 = inlined_call_operand.vmem [shape: bf16[8,8], index: 1, kind: input, shape index: {}]
  %s2 = inlined_call_operand.vmem [shape: bf16[9,8,8], index: 2, kind: input, shape index: {}]
  %s3 = inlined_call_operand.vmem [shape: f32[1,2], index: 3, kind: input, shape index: {}]
  %s4 = inlined_call_operand.vmem [shape: bf16[2,8,288], index: 4, kind: output, shape index: {}]
  %s5 = sld [smem:[#allocation0]]
  $region53: #{residual_downsample_fwd.2} parent=0
    _
  %s7 = ssub.s32 1, %s5
  %s8 = scalar_select 0, %s7, %s5
  $region1: #{residual_downsample_fwd.2} parent=0
    #allocation3 [shape = 'u8[512]{0}', space=smem, size = 0x200, scoped, tag = 'input window, operand 3, single buffered']
    #allocation4 [shape = 's32[2]{0}', space=sflag, size = 0x8, scoped, tag = 'scoped memory for residual_downsample_fwd.2']
    %9 = vsyncpa [#allocation4], 0
    loop: start=0, step=1, limit=4
    $region2: #{residual_downsample_fwd.2} parent=1 // loop_pre_header
      _
    $region3: #{residual_downsample_fwd.2} parent=1 // loop_header
      %s11 = sphi 0, %s15
      %p12 = scmp.ge.s32.totalorder %s11, 4
      %s21 = sphi 0, %s23
      %s24 = sphi 0, %s21
      %s25 = sphi 0, %s24
      %s41 = sphi 0, %s25
      %s45 = sphi 0, %s45
      %s47 = sphi 0, %s45
      %s48 = sphi 0, %s47
      %s62 = sphi 0, %s48
      %s66 = sphi 0, %s66
      %s68 = sphi 0, %s66
      %s69 = sphi 0, %s68
      %s83 = sphi 0, %s69
      %s87 = sphi 0, %s87
      %s89 = sphi 0, %s87
      %s90 = sphi 0, %s89
      %s104 = sphi 0, %s90
      %s110 = sphi 0, %s112
      %s113 = sphi 0, %s110
      %s114 = sphi 0, %s113
      %s130 = sphi 0, %s114
    $region4: #{residual_downsample_fwd.2} parent=1 // loop_header_branch
      %14 = sbr.rel (%p12) target = $region8
    $region5: #{residual_downsample_fwd.2} parent=1 // loop_body
      %s16 = ssub.s32 %s11, 1
      %s17 = ssub.s32 %s11, 2
      %s18 = sadd.s32 %s11, 1
      %s19 = ssub.s32 %s11, %s18
      %p20 = scmp.eq.s32.totalorder %s19, 0
      %s22 = sadd.s32 %s21, 1
      %s23 = scalar_select %p20, %s21, %s22
      %p26 = pneg %p20
      %p27 = scmp.eq.s32.totalorder %s11, 1
      %p28 = por %p26, %p27
      %p29 = scmp.ne.s32.totalorder %s21, %s24
      %p30 = scmp.eq.s32.totalorder %s11, 0
      %p31 = por %p29, %p30
      %p32 = scmp.ne.s32.totalorder %s21, %s24
      %p33 = scmp.eq.s32.totalorder %s16, 1
      %p34 = por %p32, %p33
      %p35 = scmp.ne.s32.totalorder %s24, %s25
      %p36 = scmp.eq.s32.totalorder %s16, 0
      %p37 = por %p35, %p36
      %p38 = scmp.ne.s32.totalorder %s24, %s25
      %p39 = scmp.eq.s32.totalorder %s17, 1
      %p40 = por %p38, %p39
      %p42 = scmp.ne.s32.totalorder %s25, %s41
      %p43 = scmp.eq.s32.totalorder %s17, 0
      %p44 = por %p42, %p43
      %s46 = sadd.s32 %s45, 1
      %p49 = scmp.eq.s32.totalorder %s11, 1
      %p50 = scmp.ne.s32.totalorder %s45, %s47
      %p51 = scmp.eq.s32.totalorder %s11, 0
      %p52 = por %p50, %p51
      %p53 = scmp.ne.s32.totalorder %s45, %s47
      %p54 = scmp.eq.s32.totalorder %s16, 1
      %p55 = por %p53, %p54
      %p56 = scmp.ne.s32.totalorder %s47, %s48
      %p57 = scmp.eq.s32.totalorder %s16, 0
      %p58 = por %p56, %p57
      %p59 = scmp.ne.s32.totalorder %s47, %s48
      %p60 = scmp.eq.s32.totalorder %s17, 1
      %p61 = por %p59, %p60
      %p63 = scmp.ne.s32.totalorder %s48, %s62
      %p64 = scmp.eq.s32.totalorder %s17, 0
      %p65 = por %p63, %p64
      %s67 = sadd.s32 %s66, 1
      %p70 = scmp.eq.s32.totalorder %s11, 1
      %p71 = scmp.ne.s32.totalorder %s66, %s68
      %p72 = scmp.eq.s32.totalorder %s11, 0
      %p73 = por %p71, %p72
      %p74 = scmp.ne.s32.totalorder %s66, %s68
      %p75 = scmp.eq.s32.totalorder %s16, 1
      %p76 = por %p74, %p75
      %p77 = scmp.ne.s32.totalorder %s68, %s69
      %p78 = scmp.eq.s32.totalorder %s16, 0
      %p79 = por %p77, %p78
      %p80 = scmp.ne.s32.totalorder %s68, %s69
      %p81 = scmp.eq.s32.totalorder %s17, 1
      %p82 = por %p80, %p81
      %p84 = scmp.ne.s32.totalorder %s69, %s83
      %p85 = scmp.eq.s32.totalorder %s17, 0
      %p86 = por %p84, %p85
      %s88 = sadd.s32 %s87, 1
      %p91 = scmp.eq.s32.totalorder %s11, 1
      %p92 = scmp.ne.s32.totalorder %s87, %s89
      %p93 = scmp.eq.s32.totalorder %s11, 0
      %p94 = por %p92, %p93
      %p95 = scmp.ne.s32.totalorder %s87, %s89
      %p96 = scmp.eq.s32.totalorder %s16, 1
      %p97 = por %p95, %p96
      %p98 = scmp.ne.s32.totalorder %s89, %s90
      %p99 = scmp.eq.s32.totalorder %s16, 0
      %p100 = por %p98, %p99
      %p101 = scmp.ne.s32.totalorder %s89, %s90
      %p102 = scmp.eq.s32.totalorder %s17, 1
      %p103 = por %p101, %p102
      %p105 = scmp.ne.s32.totalorder %s90, %s104
      %p106 = scmp.eq.s32.totalorder %s17, 0
      %p107 = por %p105, %p106
      %s108 = ssub.s32 %s11, %s18
      %p109 = scmp.eq.s32.totalorder %s108, 0
      %s111 = sadd.s32 %s110, 1
      %s112 = scalar_select %p109, %s110, %s111
      %p115 = pneg %p109
      %p116 = scmp.eq.s32.totalorder %s11, 1
      %p117 = por %p115, %p116
      %p118 = scmp.ne.s32.totalorder %s110, %s113
      %p119 = scmp.eq.s32.totalorder %s11, 0
      %p120 = por %p118, %p119
      %p121 = scmp.ne.s32.totalorder %s110, %s113
      %p122 = scmp.eq.s32.totalorder %s16, 1
      %p123 = por %p121, %p122
      %p124 = scmp.ne.s32.totalorder %s113, %s114
      %p125 = scmp.eq.s32.totalorder %s16, 0
      %p126 = por %p124, %p125
      %p127 = scmp.ne.s32.totalorder %s113, %s114
      %p128 = scmp.eq.s32.totalorder %s17, 1
      %p129 = por %p127, %p128
      %p131 = scmp.ne.s32.totalorder %s114, %s130
      %p132 = scmp.eq.s32.totalorder %s17, 0
      %p133 = por %p131, %p132
      %p134 = scmp.le.s32.totalorder 1, %s11
      %p135 = scmp.lt.s32.totalorder %s11, 3
      %p136 = pnand %p134, %p135
      %p137 = pneg %p136
      // Predicated region
      $region9: #{residual_downsample_fwd.2} parent=5 // pred_check
        _
      $region10: #{residual_downsample_fwd.2} parent=5 // pred_check_branch
        %139 = sbr.rel (%p136) target = $region12
      $region11: #{residual_downsample_fwd.2} parent=5 // pred_region
        %s140 = ssub.s32 %s11, 1
        // Predicated region
        $region13: #{residual_downsample_fwd.2} parent=11 // pred_check
          %p141 = pneg %p58
        $region14: #{residual_downsample_fwd.2} parent=11 // pred_check_branch
          %143 = sbr.rel (%p141) target = $region16
        $region15: #{residual_downsample_fwd.2} parent=11 // pred_region
          _
        $region16: #{residual_downsample_fwd.2} parent=11 // pred_fallthru
          _
        // Predicated region
        $region17: #{residual_downsample_fwd.2} parent=11 // pred_check
          %p144 = pneg %p79
        $region18: #{residual_downsample_fwd.2} parent=11 // pred_check_branch
          %146 = sbr.rel (%p144) target = $region20
        $region19: #{residual_downsample_fwd.2} parent=11 // pred_region
          _
        $region20: #{residual_downsample_fwd.2} parent=11 // pred_fallthru
          _
        // Predicated region
        $region21: #{residual_downsample_fwd.2} parent=11 // pred_check
          %p147 = pneg %p100
        $region22: #{residual_downsample_fwd.2} parent=11 // pred_check_branch
          %149 = sbr.rel (%p147) target = $region24
        $region23: #{residual_downsample_fwd.2} parent=11 // pred_region
          %s151 = ssub.s32 16, 16
          %152 = vsyncadd [#allocation4], %s151
          %s154 = sshll.u32 %s3, 4
          %s155 = int_to_ptr.vmem [resolvable:$true] %s154
          %157 = dma.vmem_to_smem %s155, 16, [#allocation3], [#allocation4]
        $region24: #{residual_downsample_fwd.2} parent=11 // pred_fallthru
          _
      $region12: #{residual_downsample_fwd.2} parent=5 // pred_fallthru
        _
      %p158 = scmp.lt.s32.totalorder %s11, 2
      // Predicated region
      $region25: #{residual_downsample_fwd.2} parent=5 // pred_check
        %p159 = pneg %p158
      $region26: #{residual_downsample_fwd.2} parent=5 // pred_check_branch
        %161 = sbr.rel (%p159) target = $region28
      $region27: #{residual_downsample_fwd.2} parent=5 // pred_region
        // Predicated region
        $region29: #{residual_downsample_fwd.2} parent=27 // pred_check
          %p162 = pneg %p31
        $region30: #{residual_downsample_fwd.2} parent=27 // pred_check_branch
          %164 = sbr.rel (%p162) target = $region32
        $region31: #{residual_downsample_fwd.2} parent=27 // pred_region
          %p165 = scmp.lt.s32.totalorder %s11, 1
          %s166 = scalar_select %p165, %s11, 1
          %s167 = smul.addr %s166, 3
          %s168 = smul.addr %s167, 4
          %s169 = scalar_lea.vmem %s0, %s168
        $region32: #{residual_downsample_fwd.2} parent=27 // pred_fallthru
          _
      $region28: #{residual_downsample_fwd.2} parent=5 // pred_fallthru
        _
      %p170 = scmp.le.s32.totalorder 1, %s11
      %p171 = scmp.lt.s32.totalorder %s11, 3
      %p172 = pnand %p170, %p171
      %p173 = pneg %p172
      // Predicated region
      $region33: #{residual_downsample_fwd.2} parent=5 // pred_check
        _
      $region34: #{residual_downsample_fwd.2} parent=5 // pred_check_branch
        %175 = sbr.rel (%p172) target = $region36
      $region35: #{residual_downsample_fwd.2} parent=5 // pred_region
        %s176 = ssub.s32 %s11, 1
        // Predicated region
        $region37: #{residual_downsample_fwd.2} parent=35 // pred_check
          %p177 = pneg %p100
        $region38: #{residual_downsample_fwd.2} parent=35 // pred_check_branch
          %179 = sbr.rel (%p177) target = $region40
        $region39: #{residual_downsample_fwd.2} parent=35 // pred_region
          %180 = dma.done [#allocation4], 16
        $region40: #{residual_downsample_fwd.2} parent=35 // pred_fallthru
          _
        %181 = sfence
        %p182 = scmp.lt.s32.totalorder %s16, 1
        %s183 = scalar_select %p182, %s16, 1
        %s184 = smul.addr %s183, 3
        %s185 = smul.addr %s184, 4
        %s186 = scalar_lea.vmem %s0, %s185
        %p187 = pneg %p37
        %p188 = pneg %p34
        %p189 = pneg %p58
        %p190 = pneg %p55
        %p191 = pneg %p79
        %p192 = pneg %p76
        %p193 = pneg %p100
        %p194 = pneg %p97
        %p195 = pneg %p126
        %p196 = pneg %p123
        %p197 = scmp.lt.s32.totalorder %s16, 1
        %s198 = scalar_select %p197, %s16, 1
        %s199 = smul.addr %s198, 3
        %s200 = smul.addr %s199, 4
        %s201 = scalar_lea.vmem %s4, %s200
        %p202 = scmp.lt.s32.totalorder %s16, 1
        %s203 = scalar_select %p202, %s16, 1
        %s204 = smul.addr %s203, 3
        %s205 = smul.addr %s204, 4
        %s206 = scalar_lea.vmem %s0, %s205
        %p207 = scmp.lt.s32.totalorder %s16, 1
        %s208 = scalar_select %p207, %s16, 1
        %s209 = smul.addr %s208, 3
        %s210 = smul.addr %s209, 4
        %s211 = scalar_lea.vmem %s4, %s210
        %v213 = vld [vmem:[%s206] sm:$0xff]
        %v214 = vld [vmem:[%s206 + $0x8] sm:$0xf]
        %v215 = vld [vmem:[%s1] sm:$0xf]
        %v218 = vunpack.c.l.b16 %v213
        %v219 = vunpack.c.h.b16 %v213
        %v220 = vunpack.c.l.b16 %v214
        %v221 = vpack.c.b16 %v218, %v218
        %v222 = vpack.c.b16 %v219, %v219
        %v223 = vpack.c.b16 %v220, %v220
        %vm224 = vcmask 64512
        %v226 = vsel %vm224, %v215, 0
        %vm228 = vcmask 1043456
        %v230 = vsel %vm228, %v221, 0
        %v233 = vsel %vm228, %v222, 0
        %v236 = vsel %vm228, %v223, 0
        %238 = vmatprep.subr.bf16.mxu0 0
        %239 = vmatpush1.bf16.msra.mxu0 0
        %240 = vmatprep.subr.bf16.mxu0 0
        %241 = vmatpush1.bf16.msra.mxu0 0
        %242 = vmatprep.subr.bf16.mxu0 0
        %243 = vmatpush1.bf16.msra.mxu0 0
        %244 = vmatprep.subr.bf16.mxu0 0
        %245 = vmatpush1.bf16.msra.mxu0 0
        %246 = vmatprep.subr.bf16.mxu0 0
        %247 = vmatpush1.bf16.msra.mxu0 0
        %248 = vmatprep.subr.bf16.mxu0 0
        %249 = vmatpush1.bf16.msra.mxu0 0
        %250 = vmatprep.subr.bf16.mxu0 0
        %251 = vmatpush1.bf16.msra.mxu0 0
        %252 = vmatprep.subr.bf16.mxu0 %v233
        %253 = vmatpush1.bf16.msra.mxu0 %v230
        %254 = vmatprep.subr.bf16.mxu0 0
        %255 = vmatpush2.bf16.msra.mxu0 0
        %256 = vmatprep.subr.bf16.mxu0 0
        %257 = vmatpush2.bf16.msra.mxu0 0
        %258 = vmatprep.subr.bf16.mxu0 0
        %259 = vmatpush2.bf16.msra.mxu0 0
        %260 = vmatprep.subr.bf16.mxu0 0
        %261 = vmatpush2.bf16.msra.mxu0 0
        %262 = vmatprep.subr.bf16.mxu0 0
        %263 = vmatpush2.bf16.msra.mxu0 0
        %264 = vmatprep.subr.bf16.mxu0 0
        %265 = vmatpush2.bf16.msra.mxu0 0
        %266 = vmatprep.subr.bf16.mxu0 0
        %267 = vmatpush2.bf16.msra.mxu0 0
        %268 = vmatprep.subr.bf16.mxu0 0
        %269 = vmatpush2.bf16.msra.mxu0 0
        %270 = vmatprep.mubr.bf16.mxu0 0
        %271 = vmatmul.mubr.bf16.gmra.mxu0 %v226
        %v272 = vpop.f32.mrf.mxu0
        %v273 = vadd.f32 0.0, %v272
        %v274 = vpop.f32.mrf.mxu0
        %v275 = vadd.f32 0.0, %v274
        %v276 = vpop.f32.mrf.mxu0
        %v277 = vpop.f32.mrf.mxu0
        %278 = vdwg.mxu0
        %279 = vmatprep.subr.bf16.mxu0 0
        %280 = vmatpush1.bf16.msra.mxu0 0
        %281 = vmatprep.subr.bf16.mxu0 0
        %282 = vmatpush1.bf16.msra.mxu0 0
        %283 = vmatprep.subr.bf16.mxu0 0
        %284 = vmatpush1.bf16.msra.mxu0 0
        %285 = vmatprep.subr.bf16.mxu0 0
        %286 = vmatpush1.bf16.msra.mxu0 0
        %287 = vmatprep.subr.bf16.mxu0 0
        %288 = vmatpush1.bf16.msra.mxu0 0
        %289 = vmatprep.subr.bf16.mxu0 0
        %290 = vmatpush1.bf16.msra.mxu0 0
        %291 = vmatprep.subr.bf16.mxu0 0
        %292 = vmatpush1.bf16.msra.mxu0 0
        %293 = vmatprep.subr.bf16.mxu0 0
        %294 = vmatpush1.bf16.msra.mxu0 %v236
        %295 = vmatprep.subr.bf16.mxu0 0
        %296 = vmatpush2.bf16.msra.mxu0 0
        %297 = vmatprep.subr.bf16.mxu0 0
        %298 = vmatpush2.bf16.msra.mxu0 0
        %299 = vmatprep.subr.bf16.mxu0 0
        %300 = vmatpush2.bf16.msra.mxu0 0
        %301 = vmatprep.subr.bf16.mxu0 0
        %302 = vmatpush2.bf16.msra.mxu0 0
        %303 = vmatprep.subr.bf16.mxu0 0
        %304 = vmatpush2.bf16.msra.mxu0 0
        %305 = vmatprep.subr.bf16.mxu0 0
        %306 = vmatpush2.bf16.msra.mxu0 0
        %307 = vmatprep.subr.bf16.mxu0 0
        %308 = vmatpush2.bf16.msra.mxu0 0
        %309 = vmatprep.subr.bf16.mxu0 0
        %310 = vmatpush2.bf16.msra.mxu0 0
        %311 = vmatprep.mubr.bf16.mxu0 0
        %312 = vmatmul.mubr.bf16.gmra.mxu0 %v226
        %v313 = vpop.f32.mrf.mxu0
        %v314 = vadd.f32 0.0, %v313
        %v315 = vpop.f32.mrf.mxu0
        %v316 = vpop.f32.mrf.mxu0
        %v317 = vpop.f32.mrf.mxu0
        %318 = vdwg.mxu0
        %s319 = sld [smem:[#allocation3]]
        %vm320 = vcmp.ge.f32.partialorder %v273, 0.0
        %vm321 = vcmp.ge.f32.partialorder %v275, 0.0
        %vm322 = vcmp.ge.f32.partialorder %v314, 0.0
        %v323 = vstv %s319
        %v324 = vmul.f32 %v323, %v273
        %v325 = vmul.f32 %v323, %v275
        %v326 = vmul.f32 %v323, %v314
        %v327 = vsel %vm320, %v273, %v324
        %v328 = vsel %vm321, %v275, %v325
        %v329 = vsel %vm322, %v314, %v326
        %v330 = vpack.c.bf16 %v327, %v327
        %v331 = vpack.c.bf16 %v328, %v328
        %v332 = vpack.c.bf16 %v329, %v329
        %v336 = vunpack.c.l.b16 %v330
        %v337 = vunpack.c.l.b16 %v331
        %v338 = vunpack.c.l.b16 %v332
        %v339 = vpack.c.b16 %v337, %v336
        %v340 = vpack.c.b16 %v338, %v338
        %343 = vst [vmem:[#allocation2] sm:$0xff] %v339
        %vm344 = vcmask 699392
        %345 = vst.msk [vmem:[#allocation2 + $0x8] sm:$0xf] %vm344, %v340
        %v346 = vld [vmem:[%s2] sm:$0xf]
        %v347 = vld [vmem:[#allocation2] sm:$0xff]
        %v348 = vld [vmem:[#allocation2 + $0x8] sm:$0xf]
        %s349 = scalar_lea.vmem %s2, 4
        %v350 = vld [vmem:[%s349] sm:$0xf]
        %v353 = vunpack.c.l.b16 %v347
        %v354 = vunpack.c.h.b16 %v347
        %v355 = vunpack.c.l.b16 %v348
        %v356 = vpack.c.b16 %v353, %v353
        %v357 = vpack.c.b16 %v354, %v354
        %v358 = vpack.c.b16 %v355, %v355
        %359 = vrot.lane.b32.xlu0 %v356, 127
        %v360 = vpop.permute.xlu0 %359
        %361 = vrot.lane.b32.xlu0 %v357, 127
        %v362 = vpop.permute.xlu0 %361
        %363 = vrot.lane.b32.xlu0 %v358, 127
        %v364 = vpop.permute.xlu0 %363
        %vm365 = vcmask 1039360
        %v366 = vsel %vm365, %v360, %v362
        %v367 = vsel %vm365, %v362, %v364
        %v369 = vsel %vm224, %v350, 0
        %v372 = vsel %vm228, %v366, 0
        %v375 = vsel %vm228, %v367, 0
        %v378 = vsel %vm228, %v364, 0
        %380 = vmatprep.subr.bf16.mxu0 0
        %381 = vmatpush1.bf16.msra.mxu0 0
        %382 = vmatprep.subr.bf16.mxu0 0
        %383 = vmatpush1.bf16.msra.mxu0 0
        %384 = vmatprep.subr.bf16.mxu0 0
        %385 = vmatpush1.bf16.msra.mxu0 0
        %386 = vmatprep.subr.bf16.mxu0 0
        %387 = vmatpush1.bf16.msra.mxu0 0
        %388 = vmatprep.subr.bf16.mxu0 0
        %389 = vmatpush1.bf16.msra.mxu0 0
        %390 = vmatprep.subr.bf16.mxu0 0
        %391 = vmatpush1.bf16.msra.mxu0 0
        %392 = vmatprep.subr.bf16.mxu0 0
        %393 = vmatpush1.bf16.msra.mxu0 0
        %394 = vmatprep.subr.bf16.mxu0 %v375
        %395 = vmatpush1.bf16.msra.mxu0 %v372
        %396 = vmatprep.subr.bf16.mxu0 0
        %397 = vmatpush2.bf16.msra.mxu0 0
        %398 = vmatprep.subr.bf16.mxu0 0
        %399 = vmatpush2.bf16.msra.mxu0 0
        %400 = vmatprep.subr.bf16.mxu0 0
        %401 = vmatpush2.bf16.msra.mxu0 0
        %402 = vmatprep.subr.bf16.mxu0 0
        %403 = vmatpush2.bf16.msra.mxu0 0
        %404 = vmatprep.subr.bf16.mxu0 0
        %405 = vmatpush2.bf16.msra.mxu0 0
        %406 = vmatprep.subr.bf16.mxu0 0
        %407 = vmatpush2.bf16.msra.mxu0 0
        %408 = vmatprep.subr.bf16.mxu0 0
        %409 = vmatpush2.bf16.msra.mxu0 0
        %410 = vmatprep.subr.bf16.mxu0 0
        %411 = vmatpush2.bf16.msra.mxu0 0
        %412 = vmatprep.mubr.bf16.mxu0 0
        %413 = vmatmul.mubr.bf16.gmra.mxu0 %v369
        %v414 = vpop.f32.mrf.mxu0
        %v415 = vadd.f32 0.0, %v414
        %v416 = vpop.f32.mrf.mxu0
        %v417 = vadd.f32 0.0, %v416
        %v418 = vpop.f32.mrf.mxu0
        %v419 = vpop.f32.mrf.mxu0
        %420 = vdwg.mxu0
        %421 = vmatprep.subr.bf16.mxu0 0
        %422 = vmatpush1.bf16.msra.mxu0 0
        %423 = vmatprep.subr.bf16.mxu0 0
        %424 = vmatpush1.bf16.msra.mxu0 0
        %425 = vmatprep.subr.bf16.mxu0 0
        %426 = vmatpush1.bf16.msra.mxu0 0
        %427 = vmatprep.subr.bf16.mxu0 0
        %428 = vmatpush1.bf16.msra.mxu0 0
        %429 = vmatprep.subr.bf16.mxu0 0
        %430 = vmatpush1.bf16.msra.mxu0 0
        %431 = vmatprep.subr.bf16.mxu0 0
        %432 = vmatpush1.bf16.msra.mxu0 0
        %433 = vmatprep.subr.bf16.mxu0 0
        %434 = vmatpush1.bf16.msra.mxu0 0
        %435 = vmatprep.subr.bf16.mxu0 0
        %436 = vmatpush1.bf16.msra.mxu0 %v378
        %437 = vmatprep.subr.bf16.mxu0 0
        %438 = vmatpush2.bf16.msra.mxu0 0
        %439 = vmatprep.subr.bf16.mxu0 0
        %440 = vmatpush2.bf16.msra.mxu0 0
        %441 = vmatprep.subr.bf16.mxu0 0
        %442 = vmatpush2.bf16.msra.mxu0 0
        %443 = vmatprep.subr.bf16.mxu0 0
        %444 = vmatpush2.bf16.msra.mxu0 0
        %445 = vmatprep.subr.bf16.mxu0 0
        %446 = vmatpush2.bf16.msra.mxu0 0
        %447 = vmatprep.subr.bf16.mxu0 0
        %448 = vmatpush2.bf16.msra.mxu0 0
        %449 = vmatprep.subr.bf16.mxu0 0
        %450 = vmatpush2.bf16.msra.mxu0 0
        %451 = vmatprep.subr.bf16.mxu0 0
        %452 = vmatpush2.bf16.msra.mxu0 0
        %453 = vmatprep.mubr.bf16.mxu0 0
        %454 = vmatmul.mubr.bf16.gmra.mxu0 %v369
        %v455 = vpop.f32.mrf.mxu0
        %v456 = vadd.f32 0.0, %v455
        %v457 = vpop.f32.mrf.mxu0
        %v458 = vpop.f32.mrf.mxu0
        %v459 = vpop.f32.mrf.mxu0
        %460 = vdwg.mxu0
        %v462 = vsel %vm224, %v346, 0
        %v465 = vsel %vm228, %v356, 0
        %v468 = vsel %vm228, %v357, 0
        %v471 = vsel %vm228, %v358, 0
        %473 = vmatprep.subr.bf16.mxu0 0
        %474 = vmatpush1.bf16.msra.mxu0 0
        %475 = vmatprep.subr.bf16.mxu0 0
        %476 = vmatpush1.bf16.msra.mxu0 0
        %477 = vmatprep.subr.bf16.mxu0 0
        %478 = vmatpush1.bf16.msra.mxu0 0
        %479 = vmatprep.subr.bf16.mxu0 0
        %480 = vmatpush1.bf16.msra.mxu0 0
        %481 = vmatprep.subr.bf16.mxu0 0
        %482 = vmatpush1.bf16.msra.mxu0 0
        %483 = vmatprep.subr.bf16.mxu0 0
        %484 = vmatpush1.bf16.msra.mxu0 0
        %485 = vmatprep.subr.bf16.mxu0 0
        %486 = vmatpush1.bf16.msra.mxu0 0
        %487 = vmatprep.subr.bf16.mxu0 %v468
        %488 = vmatpush1.bf16.msra.mxu0 %v465
        %489 = vmatprep.subr.bf16.mxu0 0
        %490 = vmatpush2.bf16.msra.mxu0 0
        %491 = vmatprep.subr.bf16.mxu0 0
        %492 = vmatpush2.bf16.msra.mxu0 0
        %493 = vmatprep.subr.bf16.mxu0 0
        %494 = vmatpush2.bf16.msra.mxu0 0
        %495 = vmatprep.subr.bf16.mxu0 0
        %496 = vmatpush2.bf16.msra.mxu0 0
        %497 = vmatprep.subr.bf16.mxu0 0
        %498 = vmatpush2.bf16.msra.mxu0 0
        %499 = vmatprep.subr.bf16.mxu0 0
        %500 = vmatpush2.bf16.msra.mxu0 0
        %501 = vmatprep.subr.bf16.mxu0 0
        %502 = vmatpush2.bf16.msra.mxu0 0
        %503 = vmatprep.subr.bf16.mxu0 0
        %504 = vmatpush2.bf16.msra.mxu0 0
        %505 = vmatprep.mubr.bf16.mxu0 0
        %506 = vmatmul.mubr.bf16.gmra.mxu0 %v462
        %v507 = vpop.f32.mrf.mxu0
        %v508 = vadd.f32 %v415, %v507
        %v509 = vpop.f32.mrf.mxu0
        %v510 = vadd.f32 %v417, %v509
        %v511 = vpop.f32.mrf.mxu0
        %v512 = vpop.f32.mrf.mxu0
        %513 = vdwg.mxu0
        %514 = vmatprep.subr.bf16.mxu0 0
        %515 = vmatpush1.bf16.msra.mxu0 0
        %516 = vmatprep.subr.bf16.mxu0 0
        %517 = vmatpush1.bf16.msra.mxu0 0
        %518 = vmatprep.subr.bf16.mxu0 0
        %519 = vmatpush1.bf16.msra.mxu0 0
        %520 = vmatprep.subr.bf16.mxu0 0
        %521 = vmatpush1.bf16.msra.mxu0 0
        %522 = vmatprep.subr.bf16.mxu0 0
        %523 = vmatpush1.bf16.msra.mxu0 0
        %524 = vmatprep.subr.bf16.mxu0 0
        %525 = vmatpush1.bf16.msra.mxu0 0
        %526 = vmatprep.subr.bf16.mxu0 0
        %527 = vmatpush1.bf16.msra.mxu0 0
        %528 = vmatprep.subr.bf16.mxu0 0
        %529 = vmatpush1.bf16.msra.mxu0 %v471
        %530 = vmatprep.subr.bf16.mxu0 0
        %531 = vmatpush2.bf16.msra.mxu0 0
        %532 = vmatprep.subr.bf16.mxu0 0
        %533 = vmatpush2.bf16.msra.mxu0 0
        %534 = vmatprep.subr.bf16.mxu0 0
        %535 = vmatpush2.bf16.msra.mxu0 0
        %536 = vmatprep.subr.bf16.mxu0 0
        %537 = vmatpush2.bf16.msra.mxu0 0
        %538 = vmatprep.subr.bf16.mxu0 0
        %539 = vmatpush2.bf16.msra.mxu0 0
        %540 = vmatprep.subr.bf16.mxu0 0
        %541 = vmatpush2.bf16.msra.mxu0 0
        %542 = vmatprep.subr.bf16.mxu0 0
        %543 = vmatpush2.bf16.msra.mxu0 0
        %544 = vmatprep.subr.bf16.mxu0 0
        %545 = vmatpush2.bf16.msra.mxu0 0
        %546 = vmatprep.mubr.bf16.mxu0 0
        %547 = vmatmul.mubr.bf16.gmra.mxu0 %v462
        %v548 = vpop.f32.mrf.mxu0
        %v549 = vadd.f32 %v456, %v548
        %v550 = vpop.f32.mrf.mxu0
        %v551 = vpop.f32.mrf.mxu0
        %v552 = vpop.f32.mrf.mxu0
        %553 = vdwg.mxu0
        %s554 = scalar_lea.vmem %s2, 8
        %v555 = vld [vmem:[%s554] sm:$0xf]
        %556 = vrot.lane.b32.xlu0 %v356, 126
        %v557 = vpop.permute.xlu0 %556
        %558 = vrot.lane.b32.xlu0 %v357, 126
        %v559 = vpop.permute.xlu0 %558
        %560 = vrot.lane.b32.xlu0 %v358, 126
        %v561 = vpop.permute.xlu0 %560
        %vm562 = vcmask 1031168
        %v563 = vsel %vm562, %v557, %v559
        %v564 = vsel %vm562, %v559, %v561
        %v566 = vsel %vm224, %v555, 0
        %v569 = vsel %vm228, %v563, 0
        %v572 = vsel %vm228, %v564, 0
        %v575 = vsel %vm228, %v561, 0
        %577 = vmatprep.subr.bf16.mxu0 0
        %578 = vmatpush1.bf16.msra.mxu0 0
        %579 = vmatprep.subr.bf16.mxu0 0
        %580 = vmatpush1.bf16.msra.mxu0 0
        %581 = vmatprep.subr.bf16.mxu0 0
        %582 = vmatpush1.bf16.msra.mxu0 0
        %583 = vmatprep.subr.bf16.mxu0 0
        %584 = vmatpush1.bf16.msra.mxu0 0
        %585 = vmatprep.subr.bf16.mxu0 0
        %586 = vmatpush1.bf16.msra.mxu0 0
        %587 = vmatprep.subr.bf16.mxu0 0
        %588 = vmatpush1.bf16.msra.mxu0 0
        %589 = vmatprep.subr.bf16.mxu0 0
        %590 = vmatpush1.bf16.msra.mxu0 0
        %591 = vmatprep.subr.bf16.mxu0 %v572
        %592 = vmatpush1.bf16.msra.mxu0 %v569
        %593 = vmatprep.subr.bf16.mxu0 0
        %594 = vmatpush2.bf16.msra.mxu0 0
        %595 = vmatprep.subr.bf16.mxu0 0
        %596 = vmatpush2.bf16.msra.mxu0 0
        %597 = vmatprep.subr.bf16.mxu0 0
        %598 = vmatpush2.bf16.msra.mxu0 0
        %599 = vmatprep.subr.bf16.mxu0 0
        %600 = vmatpush2.bf16.msra.mxu0 0
        %601 = vmatprep.subr.bf16.mxu0 0
        %602 = vmatpush2.bf16.msra.mxu0 0
        %603 = vmatprep.subr.bf16.mxu0 0
        %604 = vmatpush2.bf16.msra.mxu0 0
        %605 = vmatprep.subr.bf16.mxu0 0
        %606 = vmatpush2.bf16.msra.mxu0 0
        %607 = vmatprep.subr.bf16.mxu0 0
        %608 = vmatpush2.bf16.msra.mxu0 0
        %609 = vmatprep.mubr.bf16.mxu0 0
        %610 = vmatmul.mubr.bf16.gmra.mxu0 %v566
        %v611 = vpop.f32.mrf.mxu0
        %v612 = vadd.f32 0.0, %v611
        %v613 = vpop.f32.mrf.mxu0
        %v614 = vadd.f32 0.0, %v613
        %v615 = vpop.f32.mrf.mxu0
        %v616 = vpop.f32.mrf.mxu0
        %617 = vdwg.mxu0
        %618 = vmatprep.subr.bf16.mxu0 0
        %619 = vmatpush1.bf16.msra.mxu0 0
        %620 = vmatprep.subr.bf16.mxu0 0
        %621 = vmatpush1.bf16.msra.mxu0 0
        %622 = vmatprep.subr.bf16.mxu0 0
        %623 = vmatpush1.bf16.msra.mxu0 0
        %624 = vmatprep.subr.bf16.mxu0 0
        %625 = vmatpush1.bf16.msra.mxu0 0
        %626 = vmatprep.subr.bf16.mxu0 0
        %627 = vmatpush1.bf16.msra.mxu0 0
        %628 = vmatprep.subr.bf16.mxu0 0
        %629 = vmatpush1.bf16.msra.mxu0 0
        %630 = vmatprep.subr.bf16.mxu0 0
        %631 = vmatpush1.bf16.msra.mxu0 0
        %632 = vmatprep.subr.bf16.mxu0 0
        %633 = vmatpush1.bf16.msra.mxu0 %v575
        %634 = vmatprep.subr.bf16.mxu0 0
        %635 = vmatpush2.bf16.msra.mxu0 0
        %636 = vmatprep.subr.bf16.mxu0 0
        %637 = vmatpush2.bf16.msra.mxu0 0
        %638 = vmatprep.subr.bf16.mxu0 0
        %639 = vmatpush2.bf16.msra.mxu0 0
        %640 = vmatprep.subr.bf16.mxu0 0
        %641 = vmatpush2.bf16.msra.mxu0 0
        %642 = vmatprep.subr.bf16.mxu0 0
        %643 = vmatpush2.bf16.msra.mxu0 0
        %644 = vmatprep.subr.bf16.mxu0 0
        %645 = vmatpush2.bf16.msra.mxu0 0
        %646 = vmatprep.subr.bf16.mxu0 0
        %647 = vmatpush2.bf16.msra.mxu0 0
        %648 = vmatprep.subr.bf16.mxu0 0
        %649 = vmatpush2.bf16.msra.mxu0 0
        %650 = vmatprep.mubr.bf16.mxu0 0
        %651 = vmatmul.mubr.bf16.gmra.mxu0 %v566
        %v652 = vpop.f32.mrf.mxu0
        %v653 = vadd.f32 0.0, %v652
        %v654 = vpop.f32.mrf.mxu0
        %v655 = vpop.f32.mrf.mxu0
        %v656 = vpop.f32.mrf.mxu0
        %657 = vdwg.mxu0
        %v658 = vadd.f32 %v508, %v612
        %v659 = vadd.f32 %v510, %v614
        %v660 = vadd.f32 %v549, %v653
        %s661 = scalar_lea.vmem %s2, 12
        %v662 = vld [vmem:[%s661] sm:$0xf]
        %663 = vrot.lane.b32.xlu0 %v356, 110
        %v664 = vpop.permute.xlu0 %663
        %665 = vrot.lane.b32.xlu0 %v357, 110
        %v666 = vpop.permute.xlu0 %665
        %667 = vrot.lane.b32.xlu0 %v358, 110
        %v668 = vpop.permute.xlu0 %667
        %vm669 = vcmask 900096
        %v670 = vsel %vm669, %v664, %v666
        %v671 = vsel %vm669, %v666, %v668
        %v673 = vsel %vm224, %v662, 0
        %v676 = vsel %vm228, %v670, 0
        %v679 = vsel %vm228, %v671, 0
        %v682 = vsel %vm228, %v668, 0
        %684 = vmatprep.subr.bf16.mxu0 0
        %685 = vmatpush1.bf16.msra.mxu0 0
        %686 = vmatprep.subr.bf16.mxu0 0
        %687 = vmatpush1.bf16.msra.mxu0 0
        %688 = vmatprep.subr.bf16.mxu0 0
        %689 = vmatpush1.bf16.msra.mxu0 0
        %690 = vmatprep.subr.bf16.mxu0 0
        %691 = vmatpush1.bf16.msra.mxu0 0
        %692 = vmatprep.subr.bf16.mxu0 0
        %693 = vmatpush1.bf16.msra.mxu0 0
        %694 = vmatprep.subr.bf16.mxu0 0
        %695 = vmatpush1.bf16.msra.mxu0 0
        %696 = vmatprep.subr.bf16.mxu0 0
        %697 = vmatpush1.bf16.msra.mxu0 0
        %698 = vmatprep.subr.bf16.mxu0 %v679
        %699 = vmatpush1.bf16.msra.mxu0 %v676
        %700 = vmatprep.subr.bf16.mxu0 0
        %701 = vmatpush2.bf16.msra.mxu0 0
        %702 = vmatprep.subr.bf16.mxu0 0
        %703 = vmatpush2.bf16.msra.mxu0 0
        %704 = vmatprep.subr.bf16.mxu0 0
        %705 = vmatpush2.bf16.msra.mxu0 0
        %706 = vmatprep.subr.bf16.mxu0 0
        %707 = vmatpush2.bf16.msra.mxu0 0
        %708 = vmatprep.subr.bf16.mxu0 0
        %709 = vmatpush2.bf16.msra.mxu0 0
        %710 = vmatprep.subr.bf16.mxu0 0
        %711 = vmatpush2.bf16.msra.mxu0 0
        %712 = vmatprep.subr.bf16.mxu0 0
        %713 = vmatpush2.bf16.msra.mxu0 0
        %714 = vmatprep.subr.bf16.mxu0 0
        %715 = vmatpush2.bf16.msra.mxu0 0
        %716 = vmatprep.mubr.bf16.mxu0 0
        %717 = vmatmul.mubr.bf16.gmra.mxu0 %v673
        %v718 = vpop.f32.mrf.mxu0
        %v719 = vadd.f32 0.0, %v718
        %v720 = vpop.f32.mrf.mxu0
        %v721 = vadd.f32 0.0, %v720
        %v722 = vpop.f32.mrf.mxu0
        %v723 = vpop.f32.mrf.mxu0
        %724 = vdwg.mxu0
        %725 = vmatprep.subr.bf16.mxu0 0
        %726 = vmatpush1.bf16.msra.mxu0 0
        %727 = vmatprep.subr.bf16.mxu0 0
        %728 = vmatpush1.bf16.msra.mxu0 0
        %729 = vmatprep.subr.bf16.mxu0 0
        %730 = vmatpush1.bf16.msra.mxu0 0
        %731 = vmatprep.subr.bf16.mxu0 0
        %732 = vmatpush1.bf16.msra.mxu0 0
        %733 = vmatprep.subr.bf16.mxu0 0
        %734 = vmatpush1.bf16.msra.mxu0 0
        %735 = vmatprep.subr.bf16.mxu0 0
        %736 = vmatpush1.bf16.msra.mxu0 0
        %737 = vmatprep.subr.bf16.mxu0 0
        %738 = vmatpush1.bf16.msra.mxu0 0
        %739 = vmatprep.subr.bf16.mxu0 0
        %740 = vmatpush1.bf16.msra.mxu0 %v682
        %741 = vmatprep.subr.bf16.mxu0 0
        %742 = vmatpush2.bf16.msra.mxu0 0
        %743 = vmatprep.subr.bf16.mxu0 0
        %744 = vmatpush2.bf16.msra.mxu0 0
        %745 = vmatprep.subr.bf16.mxu0 0
        %746 = vmatpush2.bf16.msra.mxu0 0
        %747 = vmatprep.subr.bf16.mxu0 0
        %748 = vmatpush2.bf16.msra.mxu0 0
        %749 = vmatprep.subr.bf16.mxu0 0
        %750 = vmatpush2.bf16.msra.mxu0 0
        %751 = vmatprep.subr.bf16.mxu0 0
        %752 = vmatpush2.bf16.msra.mxu0 0
        %753 = vmatprep.subr.bf16.mxu0 0
        %754 = vmatpush2.bf16.msra.mxu0 0
        %755 = vmatprep.subr.bf16.mxu0 0
        %756 = vmatpush2.bf16.msra.mxu0 0
        %757 = vmatprep.mubr.bf16.mxu0 0
        %758 = vmatmul.mubr.bf16.gmra.mxu0 %v673
        %v759 = vpop.f32.mrf.mxu0
        %v760 = vadd.f32 0.0, %v759
        %v761 = vpop.f32.mrf.mxu0
        %v762 = vpop.f32.mrf.mxu0
        %v763 = vpop.f32.mrf.mxu0
        %764 = vdwg.mxu0
        %v765 = vadd.f32 %v658, %v719
        %v766 = vadd.f32 %v659, %v721
        %v767 = vadd.f32 %v660, %v760
        %s768 = scalar_lea.vmem %s2, 16
        %v769 = vld [vmem:[%s768] sm:$0xf]
        %770 = vrot.lane.b32.xlu0 %v356, 109
        %v771 = vpop.permute.xlu0 %770
        %772 = vrot.lane.b32.xlu0 %v357, 109
        %v773 = vpop.permute.xlu0 %772
        %774 = vrot.lane.b32.xlu0 %v358, 109
        %v775 = vpop.permute.xlu0 %774
        %vm776 = vcmask 891904
        %v777 = vsel %vm776, %v771, %v773
        %v778 = vsel %vm776, %v773, %v775
        %v780 = vsel %vm224, %v769, 0
        %v783 = vsel %vm228, %v777, 0
        %v786 = vsel %vm228, %v778, 0
        %v789 = vsel %vm228, %v775, 0
        %791 = vmatprep.subr.bf16.mxu0 0
        %792 = vmatpush1.bf16.msra.mxu0 0
        %793 = vmatprep.subr.bf16.mxu0 0
        %794 = vmatpush1.bf16.msra.mxu0 0
        %795 = vmatprep.subr.bf16.mxu0 0
        %796 = vmatpush1.bf16.msra.mxu0 0
        %797 = vmatprep.subr.bf16.mxu0 0
        %798 = vmatpush1.bf16.msra.mxu0 0
        %799 = vmatprep.subr.bf16.mxu0 0
        %800 = vmatpush1.bf16.msra.mxu0 0
        %801 = vmatprep.subr.bf16.mxu0 0
        %802 = vmatpush1.bf16.msra.mxu0 0
        %803 = vmatprep.subr.bf16.mxu0 0
        %804 = vmatpush1.bf16.msra.mxu0 0
        %805 = vmatprep.subr.bf16.mxu0 %v786
        %806 = vmatpush1.bf16.msra.mxu0 %v783
        %807 = vmatprep.subr.bf16.mxu0 0
        %808 = vmatpush2.bf16.msra.mxu0 0
        %809 = vmatprep.subr.bf16.mxu0 0
        %810 = vmatpush2.bf16.msra.mxu0 0
        %811 = vmatprep.subr.bf16.mxu0 0
        %812 = vmatpush2.bf16.msra.mxu0 0
        %813 = vmatprep.subr.bf16.mxu0 0
        %814 = vmatpush2.bf16.msra.mxu0 0
        %815 = vmatprep.subr.bf16.mxu0 0
        %816 = vmatpush2.bf16.msra.mxu0 0
        %817 = vmatprep.subr.bf16.mxu0 0
        %818 = vmatpush2.bf16.msra.mxu0 0
        %819 = vmatprep.subr.bf16.mxu0 0
        %820 = vmatpush2.bf16.msra.mxu0 0
        %821 = vmatprep.subr.bf16.mxu0 0
        %822 = vmatpush2.bf16.msra.mxu0 0
        %823 = vmatprep.mubr.bf16.mxu0 0
        %824 = vmatmul.mubr.bf16.gmra.mxu0 %v780
        %v825 = vpop.f32.mrf.mxu0
        %v826 = vadd.f32 0.0, %v825
        %v827 = vpop.f32.mrf.mxu0
        %v828 = vadd.f32 0.0, %v827
        %v829 = vpop.f32.mrf.mxu0
        %v830 = vpop.f32.mrf.mxu0
        %831 = vdwg.mxu0
        %832 = vmatprep.subr.bf16.mxu0 0
        %833 = vmatpush1.bf16.msra.mxu0 0
        %834 = vmatprep.subr.bf16.mxu0 0
        %835 = vmatpush1.bf16.msra.mxu0 0
        %836 = vmatprep.subr.bf16.mxu0 0
        %837 = vmatpush1.bf16.msra.mxu0 0
        %838 = vmatprep.subr.bf16.mxu0 0
        %839 = vmatpush1.bf16.msra.mxu0 0
        %840 = vmatprep.subr.bf16.mxu0 0
        %841 = vmatpush1.bf16.msra.mxu0 0
        %842 = vmatprep.subr.bf16.mxu0 0
        %843 = vmatpush1.bf16.msra.mxu0 0
        %844 = vmatprep.subr.bf16.mxu0 0
        %845 = vmatpush1.bf16.msra.mxu0 0
        %846 = vmatprep.subr.bf16.mxu0 0
        %847 = vmatpush1.bf16.msra.mxu0 %v789
        %848 = vmatprep.subr.bf16.mxu0 0
        %849 = vmatpush2.bf16.msra.mxu0 0
        %850 = vmatprep.subr.bf16.mxu0 0
        %851 = vmatpush2.bf16.msra.mxu0 0
        %852 = vmatprep.subr.bf16.mxu0 0
        %853 = vmatpush2.bf16.msra.mxu0 0
        %854 = vmatprep.subr.bf16.mxu0 0
        %855 = vmatpush2.bf16.msra.mxu0 0
        %856 = vmatprep.subr.bf16.mxu0 0
        %857 = vmatpush2.bf16.msra.mxu0 0
        %858 = vmatprep.subr.bf16.mxu0 0
        %859 = vmatpush2.bf16.msra.mxu0 0
        %860 = vmatprep.subr.bf16.mxu0 0
        %861 = vmatpush2.bf16.msra.mxu0 0
        %862 = vmatprep.subr.bf16.mxu0 0
        %863 = vmatpush2.bf16.msra.mxu0 0
        %864 = vmatprep.mubr.bf16.mxu0 0
        %865 = vmatmul.mubr.bf16.gmra.mxu0 %v780
        %v866 = vpop.f32.mrf.mxu0
        %v867 = vadd.f32 0.0, %v866
        %v868 = vpop.f32.mrf.mxu0
        %v869 = vpop.f32.mrf.mxu0
        %v870 = vpop.f32.mrf.mxu0
        %871 = vdwg.mxu0
        %v872 = vadd.f32 %v765, %v826
        %v873 = vadd.f32 %v766, %v828
        %v874 = vadd.f32 %v767, %v867
        %s875 = scalar_lea.vmem %s2, 20
        %v876 = vld [vmem:[%s875] sm:$0xf]
        %877 = vrot.lane.b32.xlu0 %v356, 108
        %v878 = vpop.permute.xlu0 %877
        %879 = vrot.lane.b32.xlu0 %v357, 108
        %v880 = vpop.permute.xlu0 %879
        %881 = vrot.lane.b32.xlu0 %v358, 108
        %v882 = vpop.permute.xlu0 %881
        %vm883 = vcmask 883712
        %v884 = vsel %vm883, %v878, %v880
        %v885 = vsel %vm883, %v880, %v882
        %v887 = vsel %vm224, %v876, 0
        %v890 = vsel %vm228, %v884, 0
        %v893 = vsel %vm228, %v885, 0
        %v896 = vsel %vm228, %v882, 0
        %898 = vmatprep.subr.bf16.mxu0 0
        %899 = vmatpush1.bf16.msra.mxu0 0
        %900 = vmatprep.subr.bf16.mxu0 0
        %901 = vmatpush1.bf16.msra.mxu0 0
        %902 = vmatprep.subr.bf16.mxu0 0
        %903 = vmatpush1.bf16.msra.mxu0 0
        %904 = vmatprep.subr.bf16.mxu0 0
        %905 = vmatpush1.bf16.msra.mxu0 0
        %906 = vmatprep.subr.bf16.mxu0 0
        %907 = vmatpush1.bf16.msra.mxu0 0
        %908 = vmatprep.subr.bf16.mxu0 0
        %909 = vmatpush1.bf16.msra.mxu0 0
        %910 = vmatprep.subr.bf16.mxu0 0
        %911 = vmatpush1.bf16.msra.mxu0 0
        %912 = vmatprep.subr.bf16.mxu0 %v893
        %913 = vmatpush1.bf16.msra.mxu0 %v890
        %914 = vmatprep.subr.bf16.mxu0 0
        %915 = vmatpush2.bf16.msra.mxu0 0
        %916 = vmatprep.subr.bf16.mxu0 0
        %917 = vmatpush2.bf16.msra.mxu0 0
        %918 = vmatprep.subr.bf16.mxu0 0
        %919 = vmatpush2.bf16.msra.mxu0 0
        %920 = vmatprep.subr.bf16.mxu0 0
        %921 = vmatpush2.bf16.msra.mxu0 0
        %922 = vmatprep.subr.bf16.mxu0 0
        %923 = vmatpush2.bf16.msra.mxu0 0
        %924 = vmatprep.subr.bf16.mxu0 0
        %925 = vmatpush2.bf16.msra.mxu0 0
        %926 = vmatprep.subr.bf16.mxu0 0
        %927 = vmatpush2.bf16.msra.mxu0 0
        %928 = vmatprep.subr.bf16.mxu0 0
        %929 = vmatpush2.bf16.msra.mxu0 0
        %930 = vmatprep.mubr.bf16.mxu0 0
        %931 = vmatmul.mubr.bf16.gmra.mxu0 %v887
        %v932 = vpop.f32.mrf.mxu0
        %v933 = vadd.f32 0.0, %v932
        %v934 = vpop.f32.mrf.mxu0
        %v935 = vadd.f32 0.0, %v934
        %v936 = vpop.f32.mrf.mxu0
        %v937 = vpop.f32.mrf.mxu0
        %938 = vdwg.mxu0
        %939 = vmatprep.subr.bf16.mxu0 0
        %940 = vmatpush1.bf16.msra.mxu0 0
        %941 = vmatprep.subr.bf16.mxu0 0
        %942 = vmatpush1.bf16.msra.mxu0 0
        %943 = vmatprep.subr.bf16.mxu0 0
        %944 = vmatpush1.bf16.msra.mxu0 0
        %945 = vmatprep.subr.bf16.mxu0 0
        %946 = vmatpush1.bf16.msra.mxu0 0
        %947 = vmatprep.subr.bf16.mxu0 0
        %948 = vmatpush1.bf16.msra.mxu0 0
        %949 = vmatprep.subr.bf16.mxu0 0
        %950 = vmatpush1.bf16.msra.mxu0 0
        %951 = vmatprep.subr.bf16.mxu0 0
        %952 = vmatpush1.bf16.msra.mxu0 0
        %953 = vmatprep.subr.bf16.mxu0 0
        %954 = vmatpush1.bf16.msra.mxu0 %v896
        %955 = vmatprep.subr.bf16.mxu0 0
        %956 = vmatpush2.bf16.msra.mxu0 0
        %957 = vmatprep.subr.bf16.mxu0 0
        %958 = vmatpush2.bf16.msra.mxu0 0
        %959 = vmatprep.subr.bf16.mxu0 0
        %960 = vmatpush2.bf16.msra.mxu0 0
        %961 = vmatprep.subr.bf16.mxu0 0
        %962 = vmatpush2.bf16.msra.mxu0 0
        %963 = vmatprep.subr.bf16.mxu0 0
        %964 = vmatpush2.bf16.msra.mxu0 0
        %965 = vmatprep.subr.bf16.mxu0 0
        %966 = vmatpush2.bf16.msra.mxu0 0
        %967 = vmatprep.subr.bf16.mxu0 0
        %968 = vmatpush2.bf16.msra.mxu0 0
        %969 = vmatprep.subr.bf16.mxu0 0
        %970 = vmatpush2.bf16.msra.mxu0 0
        %971 = vmatprep.mubr.bf16.mxu0 0
        %972 = vmatmul.mubr.bf16.gmra.mxu0 %v887
        %v973 = vpop.f32.mrf.mxu0
        %v974 = vadd.f32 0.0, %v973
        %v975 = vpop.f32.mrf.mxu0
        %v976 = vpop.f32.mrf.mxu0
        %v977 = vpop.f32.mrf.mxu0
        %978 = vdwg.mxu0
        %v979 = vadd.f32 %v872, %v933
        %v980 = vadd.f32 %v873, %v935
        %v981 = vadd.f32 %v874, %v974
        %s982 = scalar_lea.vmem %s2, 24
        %v983 = vld [vmem:[%s982] sm:$0xf]
        %984 = vrot.lane.b32.xlu0 %v356, 92
        %v985 = vpop.permute.xlu0 %984
        %986 = vrot.lane.b32.xlu0 %v357, 92
        %v987 = vpop.permute.xlu0 %986
        %988 = vrot.lane.b32.xlu0 %v358, 92
        %v989 = vpop.permute.xlu0 %988
        %vm990 = vcmask 752640
        %v991 = vsel %vm990, %v985, %v987
        %v992 = vsel %vm990, %v987, %v989
        %v994 = vsel %vm224, %v983, 0
        %v997 = vsel %vm228, %v991, 0
        %v1000 = vsel %vm228, %v992, 0
        %v1003 = vsel %vm228, %v989, 0
        %1005 = vmatprep.subr.bf16.mxu0 0
        %1006 = vmatpush1.bf16.msra.mxu0 0
        %1007 = vmatprep.subr.bf16.mxu0 0
        %1008 = vmatpush1.bf16.msra.mxu0 0
        %1009 = vmatprep.subr.bf16.mxu0 0
        %1010 = vmatpush1.bf16.msra.mxu0 0
        %1011 = vmatprep.subr.bf16.mxu0 0
        %1012 = vmatpush1.bf16.msra.mxu0 0
        %1013 = vmatprep.subr.bf16.mxu0 0
        %1014 = vmatpush1.bf16.msra.mxu0 0
        %1015 = vmatprep.subr.bf16.mxu0 0
        %1016 = vmatpush1.bf16.msra.mxu0 0
        %1017 = vmatprep.subr.bf16.mxu0 0
        %1018 = vmatpush1.bf16.msra.mxu0 0
        %1019 = vmatprep.subr.bf16.mxu0 %v1000
        %1020 = vmatpush1.bf16.msra.mxu0 %v997
        %1021 = vmatprep.subr.bf16.mxu0 0
        %1022 = vmatpush2.bf16.msra.mxu0 0
        %1023 = vmatprep.subr.bf16.mxu0 0
        %1024 = vmatpush2.bf16.msra.mxu0 0
        %1025 = vmatprep.subr.bf16.mxu0 0
        %1026 = vmatpush2.bf16.msra.mxu0 0
        %1027 = vmatprep.subr.bf16.mxu0 0
        %1028 = vmatpush2.bf16.msra.mxu0 0
        %1029 = vmatprep.subr.bf16.mxu0 0
        %1030 = vmatpush2.bf16.msra.mxu0 0
        %1031 = vmatprep.subr.bf16.mxu0 0
        %1032 = vmatpush2.bf16.msra.mxu0 0
        %1033 = vmatprep.subr.bf16.mxu0 0
        %1034 = vmatpush2.bf16.msra.mxu0 0
        %1035 = vmatprep.subr.bf16.mxu0 0
        %1036 = vmatpush2.bf16.msra.mxu0 0
        %1037 = vmatprep.mubr.bf16.mxu0 0
        %1038 = vmatmul.mubr.bf16.gmra.mxu0 %v994
        %v1039 = vpop.f32.mrf.mxu0
        %v1040 = vadd.f32 0.0, %v1039
        %v1041 = vpop.f32.mrf.mxu0
        %v1042 = vadd.f32 0.0, %v1041
        %v1043 = vpop.f32.mrf.mxu0
        %v1044 = vpop.f32.mrf.mxu0
        %1045 = vdwg.mxu0
        %1046 = vmatprep.subr.bf16.mxu0 0
        %1047 = vmatpush1.bf16.msra.mxu0 0
        %1048 = vmatprep.subr.bf16.mxu0 0
        %1049 = vmatpush1.bf16.msra.mxu0 0
        %1050 = vmatprep.subr.bf16.mxu0 0
        %1051 = vmatpush1.bf16.msra.mxu0 0
        %1052 = vmatprep.subr.bf16.mxu0 0
        %1053 = vmatpush1.bf16.msra.mxu0 0
        %1054 = vmatprep.subr.bf16.mxu0 0
        %1055 = vmatpush1.bf16.msra.mxu0 0
        %1056 = vmatprep.subr.bf16.mxu0 0
        %1057 = vmatpush1.bf16.msra.mxu0 0
        %1058 = vmatprep.subr.bf16.mxu0 0
        %1059 = vmatpush1.bf16.msra.mxu0 0
        %1060 = vmatprep.subr.bf16.mxu0 0
        %1061 = vmatpush1.bf16.msra.mxu0 %v1003
        %1062 = vmatprep.subr.bf16.mxu0 0
        %1063 = vmatpush2.bf16.msra.mxu0 0
        %1064 = vmatprep.subr.bf16.mxu0 0
        %1065 = vmatpush2.bf16.msra.mxu0 0
        %1066 = vmatprep.subr.bf16.mxu0 0
        %1067 = vmatpush2.bf16.msra.mxu0 0
        %1068 = vmatprep.subr.bf16.mxu0 0
        %1069 = vmatpush2.bf16.msra.mxu0 0
        %1070 = vmatprep.subr.bf16.mxu0 0
        %1071 = vmatpush2.bf16.msra.mxu0 0
        %1072 = vmatprep.subr.bf16.mxu0 0
        %1073 = vmatpush2.bf16.msra.mxu0 0
        %1074 = vmatprep.subr.bf16.mxu0 0
        %1075 = vmatpush2.bf16.msra.mxu0 0
        %1076 = vmatprep.subr.bf16.mxu0 0
        %1077 = vmatpush2.bf16.msra.mxu0 0
        %1078 = vmatprep.mubr.bf16.mxu0 0
        %1079 = vmatmul.mubr.bf16.gmra.mxu0 %v994
        %v1080 = vpop.f32.mrf.mxu0
        %v1081 = vadd.f32 0.0, %v1080
        %v1082 = vpop.f32.mrf.mxu0
        %v1083 = vpop.f32.mrf.mxu0
        %v1084 = vpop.f32.mrf.mxu0
        %1085 = vdwg.mxu0
        %v1086 = vadd.f32 %v979, %v1040
        %v1087 = vadd.f32 %v980, %v1042
        %v1088 = vadd.f32 %v981, %v1081
        %s1089 = scalar_lea.vmem %s2, 28
        %v1090 = vld [vmem:[%s1089] sm:$0xf]
        %1091 = vrot.lane.b32.xlu0 %v356, 91
        %v1092 = vpop.permute.xlu0 %1091
        %1093 = vrot.lane.b32.xlu0 %v357, 91
        %v1094 = vpop.permute.xlu0 %1093
        %1095 = vrot.lane.b32.xlu0 %v358, 91
        %v1096 = vpop.permute.xlu0 %1095
        %vm1097 = vcmask 744448
        %v1098 = vsel %vm1097, %v1092, %v1094
        %v1099 = vsel %vm1097, %v1094, %v1096
        %v1101 = vsel %vm224, %v1090, 0
        %v1104 = vsel %vm228, %v1098, 0
        %v1107 = vsel %vm228, %v1099, 0
        %v1110 = vsel %vm228, %v1096, 0
        %1112 = vmatprep.subr.bf16.mxu0 0
        %1113 = vmatpush1.bf16.msra.mxu0 0
        %1114 = vmatprep.subr.bf16.mxu0 0
        %1115 = vmatpush1.bf16.msra.mxu0 0
        %1116 = vmatprep.subr.bf16.mxu0 0
        %1117 = vmatpush1.bf16.msra.mxu0 0
        %1118 = vmatprep.subr.bf16.mxu0 0
        %1119 = vmatpush1.bf16.msra.mxu0 0
        %1120 = vmatprep.subr.bf16.mxu0 0
        %1121 = vmatpush1.bf16.msra.mxu0 0
        %1122 = vmatprep.subr.bf16.mxu0 0
        %1123 = vmatpush1.bf16.msra.mxu0 0
        %1124 = vmatprep.subr.bf16.mxu0 0
        %1125 = vmatpush1.bf16.msra.mxu0 0
        %1126 = vmatprep.subr.bf16.mxu0 %v1107
        %1127 = vmatpush1.bf16.msra.mxu0 %v1104
        %1128 = vmatprep.subr.bf16.mxu0 0
        %1129 = vmatpush2.bf16.msra.mxu0 0
        %1130 = vmatprep.subr.bf16.mxu0 0
        %1131 = vmatpush2.bf16.msra.mxu0 0
        %1132 = vmatprep.subr.bf16.mxu0 0
        %1133 = vmatpush2.bf16.msra.mxu0 0
        %1134 = vmatprep.subr.bf16.mxu0 0
        %1135 = vmatpush2.bf16.msra.mxu0 0
        %1136 = vmatprep.subr.bf16.mxu0 0
        %1137 = vmatpush2.bf16.msra.mxu0 0
        %1138 = vmatprep.subr.bf16.mxu0 0
        %1139 = vmatpush2.bf16.msra.mxu0 0
        %1140 = vmatprep.subr.bf16.mxu0 0
        %1141 = vmatpush2.bf16.msra.mxu0 0
        %1142 = vmatprep.subr.bf16.mxu0 0
        %1143 = vmatpush2.bf16.msra.mxu0 0
        %1144 = vmatprep.mubr.bf16.mxu0 0
        %1145 = vmatmul.mubr.bf16.gmra.mxu0 %v1101
        %v1146 = vpop.f32.mrf.mxu0
        %v1147 = vadd.f32 0.0, %v1146
        %v1148 = vpop.f32.mrf.mxu0
        %v1149 = vadd.f32 0.0, %v1148
        %v1150 = vpop.f32.mrf.mxu0
        %v1151 = vpop.f32.mrf.mxu0
        %1152 = vdwg.mxu0
        %1153 = vmatprep.subr.bf16.mxu0 0
        %1154 = vmatpush1.bf16.msra.mxu0 0
        %1155 = vmatprep.subr.bf16.mxu0 0
        %1156 = vmatpush1.bf16.msra.mxu0 0
        %1157 = vmatprep.subr.bf16.mxu0 0
        %1158 = vmatpush1.bf16.msra.mxu0 0
        %1159 = vmatprep.subr.bf16.mxu0 0
        %1160 = vmatpush1.bf16.msra.mxu0 0
        %1161 = vmatprep.subr.bf16.mxu0 0
        %1162 = vmatpush1.bf16.msra.mxu0 0
        %1163 = vmatprep.subr.bf16.mxu0 0
        %1164 = vmatpush1.bf16.msra.mxu0 0
        %1165 = vmatprep.subr.bf16.mxu0 0
        %1166 = vmatpush1.bf16.msra.mxu0 0
        %1167 = vmatprep.subr.bf16.mxu0 0
        %1168 = vmatpush1.bf16.msra.mxu0 %v1110
        %1169 = vmatprep.subr.bf16.mxu0 0
        %1170 = vmatpush2.bf16.msra.mxu0 0
        %1171 = vmatprep.subr.bf16.mxu0 0
        %1172 = vmatpush2.bf16.msra.mxu0 0
        %1173 = vmatprep.subr.bf16.mxu0 0
        %1174 = vmatpush2.bf16.msra.mxu0 0
        %1175 = vmatprep.subr.bf16.mxu0 0
        %1176 = vmatpush2.bf16.msra.mxu0 0
        %1177 = vmatprep.subr.bf16.mxu0 0
        %1178 = vmatpush2.bf16.msra.mxu0 0
        %1179 = vmatprep.subr.bf16.mxu0 0
        %1180 = vmatpush2.bf16.msra.mxu0 0
        %1181 = vmatprep.subr.bf16.mxu0 0
        %1182 = vmatpush2.bf16.msra.mxu0 0
        %1183 = vmatprep.subr.bf16.mxu0 0
        %1184 = vmatpush2.bf16.msra.mxu0 0
        %1185 = vmatprep.mubr.bf16.mxu0 0
        %1186 = vmatmul.mubr.bf16.gmra.mxu0 %v1101
        %v1187 = vpop.f32.mrf.mxu0
        %v1188 = vadd.f32 0.0, %v1187
        %v1189 = vpop.f32.mrf.mxu0
        %v1190 = vpop.f32.mrf.mxu0
        %v1191 = vpop.f32.mrf.mxu0
        %1192 = vdwg.mxu0
        %v1193 = vadd.f32 %v1086, %v1147
        %v1194 = vadd.f32 %v1087, %v1149
        %v1195 = vadd.f32 %v1088, %v1188
        %s1196 = scalar_lea.vmem %s2, 32
        %v1197 = vld [vmem:[%s1196] sm:$0xf]
        %1198 = vrot.lane.b32.xlu0 %v356, 90
        %v1199 = vpop.permute.xlu0 %1198
        %1200 = vrot.lane.b32.xlu0 %v357, 90
        %v1201 = vpop.permute.xlu0 %1200
        %1202 = vrot.lane.b32.xlu0 %v358, 90
        %v1203 = vpop.permute.xlu0 %1202
        %vm1204 = vcmask 736256
        %v1205 = vsel %vm1204, %v1199, %v1201
        %v1206 = vsel %vm1204, %v1201, %v1203
        %v1208 = vsel %vm224, %v1197, 0
        %v1211 = vsel %vm228, %v1205, 0
        %v1214 = vsel %vm228, %v1206, 0
        %v1217 = vsel %vm228, %v1203, 0
        %1219 = vmatprep.subr.bf16.mxu0 0
        %1220 = vmatpush1.bf16.msra.mxu0 0
        %1221 = vmatprep.subr.bf16.mxu0 0
        %1222 = vmatpush1.bf16.msra.mxu0 0
        %1223 = vmatprep.subr.bf16.mxu0 0
        %1224 = vmatpush1.bf16.msra.mxu0 0
        %1225 = vmatprep.subr.bf16.mxu0 0
        %1226 = vmatpush1.bf16.msra.mxu0 0
        %1227 = vmatprep.subr.bf16.mxu0 0
        %1228 = vmatpush1.bf16.msra.mxu0 0
        %1229 = vmatprep.subr.bf16.mxu0 0
        %1230 = vmatpush1.bf16.msra.mxu0 0
        %1231 = vmatprep.subr.bf16.mxu0 0
        %1232 = vmatpush1.bf16.msra.mxu0 0
        %1233 = vmatprep.subr.bf16.mxu0 %v1214
        %1234 = vmatpush1.bf16.msra.mxu0 %v1211
        %1235 = vmatprep.subr.bf16.mxu0 0
        %1236 = vmatpush2.bf16.msra.mxu0 0
        %1237 = vmatprep.subr.bf16.mxu0 0
        %1238 = vmatpush2.bf16.msra.mxu0 0
        %1239 = vmatprep.subr.bf16.mxu0 0
        %1240 = vmatpush2.bf16.msra.mxu0 0
        %1241 = vmatprep.subr.bf16.mxu0 0
        %1242 = vmatpush2.bf16.msra.mxu0 0
        %1243 = vmatprep.subr.bf16.mxu0 0
        %1244 = vmatpush2.bf16.msra.mxu0 0
        %1245 = vmatprep.subr.bf16.mxu0 0
        %1246 = vmatpush2.bf16.msra.mxu0 0
        %1247 = vmatprep.subr.bf16.mxu0 0
        %1248 = vmatpush2.bf16.msra.mxu0 0
        %1249 = vmatprep.subr.bf16.mxu0 0
        %1250 = vmatpush2.bf16.msra.mxu0 0
        %1251 = vmatprep.mubr.bf16.mxu0 0
        %1252 = vmatmul.mubr.bf16.gmra.mxu0 %v1208
        %v1253 = vpop.f32.mrf.mxu0
        %v1254 = vadd.f32 0.0, %v1253
        %v1255 = vpop.f32.mrf.mxu0
        %v1256 = vadd.f32 0.0, %v1255
        %v1257 = vpop.f32.mrf.mxu0
        %v1258 = vpop.f32.mrf.mxu0
        %1259 = vdwg.mxu0
        %1260 = vmatprep.subr.bf16.mxu0 0
        %1261 = vmatpush1.bf16.msra.mxu0 0
        %1262 = vmatprep.subr.bf16.mxu0 0
        %1263 = vmatpush1.bf16.msra.mxu0 0
        %1264 = vmatprep.subr.bf16.mxu0 0
        %1265 = vmatpush1.bf16.msra.mxu0 0
        %1266 = vmatprep.subr.bf16.mxu0 0
        %1267 = vmatpush1.bf16.msra.mxu0 0
        %1268 = vmatprep.subr.bf16.mxu0 0
        %1269 = vmatpush1.bf16.msra.mxu0 0
        %1270 = vmatprep.subr.bf16.mxu0 0
        %1271 = vmatpush1.bf16.msra.mxu0 0
        %1272 = vmatprep.subr.bf16.mxu0 0
        %1273 = vmatpush1.bf16.msra.mxu0 0
        %1274 = vmatprep.subr.bf16.mxu0 0
        %1275 = vmatpush1.bf16.msra.mxu0 %v1217
        %1276 = vmatprep.subr.bf16.mxu0 0
        %1277 = vmatpush2.bf16.msra.mxu0 0
        %1278 = vmatprep.subr.bf16.mxu0 0
        %1279 = vmatpush2.bf16.msra.mxu0 0
        %1280 = vmatprep.subr.bf16.mxu0 0
        %1281 = vmatpush2.bf16.msra.mxu0 0
        %1282 = vmatprep.subr.bf16.mxu0 0
        %1283 = vmatpush2.bf16.msra.mxu0 0
        %1284 = vmatprep.subr.bf16.mxu0 0
        %1285 = vmatpush2.bf16.msra.mxu0 0
        %1286 = vmatprep.subr.bf16.mxu0 0
        %1287 = vmatpush2.bf16.msra.mxu0 0
        %1288 = vmatprep.subr.bf16.mxu0 0
        %1289 = vmatpush2.bf16.msra.mxu0 0
        %1290 = vmatprep.subr.bf16.mxu0 0
        %1291 = vmatpush2.bf16.msra.mxu0 0
        %1292 = vmatprep.mubr.bf16.mxu0 0
        %1293 = vmatmul.mubr.bf16.gmra.mxu0 %v1208
        %v1294 = vpop.f32.mrf.mxu0
        %v1295 = vadd.f32 0.0, %v1294
        %v1296 = vpop.f32.mrf.mxu0
        %v1297 = vpop.f32.mrf.mxu0
        %v1298 = vpop.f32.mrf.mxu0
        %1299 = vdwg.mxu0
        %v1300 = vadd.f32 %v1193, %v1254
        %v1301 = vadd.f32 %v1194, %v1256
        %v1302 = vadd.f32 %v1195, %v1295
        %s1303 = sld [smem:[#allocation3 + $0x1]]
        %vm1304 = vcmp.ge.f32.partialorder %v1300, 0.0
        %vm1305 = vcmp.ge.f32.partialorder %v1301, 0.0
        %vm1306 = vcmp.ge.f32.partialorder %v1302, 0.0
        %v1307 = vstv %s1303
        %v1308 = vmul.f32 %v1307, %v1300
        %v1309 = vmul.f32 %v1307, %v1301
        %v1310 = vmul.f32 %v1307, %v1302
        %v1311 = vsel %vm1304, %v1300, %v1308
        %v1312 = vsel %vm1305, %v1301, %v1309
        %v1313 = vsel %vm1306, %v1302, %v1310
        %v1314 = vpack.c.bf16 %v1311, %v1311
        %v1315 = vpack.c.bf16 %v1312, %v1312
        %v1316 = vpack.c.bf16 %v1313, %v1313
        %v1320 = vunpack.c.l.b16 %v1314
        %v1321 = vunpack.c.l.b16 %v1315
        %v1322 = vunpack.c.l.b16 %v1316
        %v1323 = vpack.c.b16 %v1321, %v1320
        %v1324 = vpack.c.b16 %v1322, %v1322
        %1327 = vst [vmem:[%s211] sm:$0xff] %v1323
        %vm1328 = vcmask 257024
        %1329 = vst.msk [vmem:[%s211 + $0x8] sm:$0xf] %vm1328, %v1324
        %p1330 = scmp.lt.s32.totalorder %s16, 1
        %s1331 = scalar_select %p1330, %s16, 1
        %s1332 = smul.addr %s1331, 3
        %s1333 = smul.addr %s1332, 4
        %s1334 = scalar_lea.vmem %s4, %s1333
        // Predicated region
        $region41: #{residual_downsample_fwd.2} parent=35 // pred_check
          %p1335 = pneg %p123
        $region42: #{residual_downsample_fwd.2} parent=35 // pred_check_branch
          %1337 = sbr.rel (%p1335) target = $region44
        $region43: #{residual_downsample_fwd.2} parent=35 // pred_region
          _
        $region44: #{residual_downsample_fwd.2} parent=35 // pred_fallthru
          _
      $region36: #{residual_downsample_fwd.2} parent=5 // pred_fallthru
        _
      %p1338 = scmp.le.s32.totalorder 2, %s11
      // Predicated region
      $region45: #{residual_downsample_fwd.2} parent=5 // pred_check
        %p1339 = pneg %p1338
      $region46: #{residual_downsample_fwd.2} parent=5 // pred_check_branch
        %1341 = sbr.rel (%p1339) target = $region48
      $region47: #{residual_downsample_fwd.2} parent=5 // pred_region
        %s1342 = ssub.s32 %s11, 2
        // Predicated region
        $region49: #{residual_downsample_fwd.2} parent=47 // pred_check
          %p1343 = pneg %p129
        $region50: #{residual_downsample_fwd.2} parent=47 // pred_check_branch
          %1345 = sbr.rel (%p1343) target = $region52
        $region51: #{residual_downsample_fwd.2} parent=47 // pred_region
          %p1346 = scmp.lt.s32.totalorder %s17, 1
          %s1347 = scalar_select %p1346, %s17, 1
          %s1348 = smul.addr %s1347, 3
          %s1349 = smul.addr %s1348, 4
          %s1350 = scalar_lea.vmem %s4, %s1349
        $region52: #{residual_downsample_fwd.2} parent=47 // pred_fallthru
          _
      $region48: #{residual_downsample_fwd.2} parent=5 // pred_fallthru
        _
    $region6: #{residual_downsample_fwd.2} parent=1 // loop_footer
      %s15 = sadd.s32 1, %s11
    $region7: #{residual_downsample_fwd.2} parent=1 // loop_footer_branch
      %10 = sbr.rel target = $region3
    $region8: #{residual_downsample_fwd.2} parent=1 // loop_exit
      _
    %1351 = vsyncpa [#allocation4], 1
    %s1352 = scalar_lea.sflag [#allocation4], 1
    %1353 = vsyncpa %s1352, 1

// kernel: residual_downsample_fwd.3
$region0: #{residual_downsample_fwd.3}
  #allocation0 [shape = 'u32[]', space=smem, size = 0x4, offset = 0x4, fixed_abs, tag = 'smem constant byte address 0x4 - core index']
  #allocation1 [shape = 'u32[144,128]{1,0:T(1,128)}', space=vmem, size = 0x12000, scoped, tag = 'internal scratch']
  %s0 = inlined_call_operand.vmem [shape: bf16[8,32], index: 0, kind: input, shape index: {}]
  %s1 = inlined_call_operand.vmem [shape: bf16[16,8], index: 1, kind: input, shape index: {}]
  %s2 = inlined_call_operand.vmem [shape: bf16[8,32], index: 2, kind: input, shape index: {}]
  %s3 = inlined_call_operand.vmem [shape: bf16[16,8], index: 3, kind: input, shape index: {}]
  %s4 = inlined_call_operand.vmem [shape: bf16[32,128], index: 4, kind: input, shape index: {}]
  %s5 = inlined_call_operand.vmem [shape: bf16[32,128], index: 5, kind: input, shape index: {}]
  %s6 = inlined_call_operand.vmem [shape: f32[1,2], index: 6, kind: input, shape index: {}]
  %s7 = inlined_call_operand.vmem [shape: f32[16,128], index: 7, kind: output, shape index: {}]
  %s8 = sld [smem:[#allocation0]]
  $region42: #{residual_downsample_fwd.3} parent=0
    _
  %s10 = ssub.s32 1, %s8
  %s11 = scalar_select 0, %s10, %s8
  $region1: #{residual_downsample_fwd.3} parent=0
    #allocation2 [shape = 'u8[512]{0}', space=smem, size = 0x200, scoped, tag = 'input window, operand 6, single buffered']
    #allocation3 [shape = 's32[1]{0}', space=sflag, size = 0x4, scoped, tag = 'scoped memory for residual_downsample_fwd.3']
    %12 = vsyncpa [#allocation3], 0
    // Predicated region
    $region2: #{residual_downsample_fwd.3} parent=1 // pred_check
      _
    $region3: #{residual_downsample_fwd.3} parent=1 // pred_check_branch
      %14 = sbr.rel (0) target = $region5
    $region4: #{residual_downsample_fwd.3} parent=1 // pred_region
      _
    $region5: #{residual_downsample_fwd.3} parent=1 // pred_fallthru
      _
    // Predicated region
    $region6: #{residual_downsample_fwd.3} parent=1 // pred_check
      _
    $region7: #{residual_downsample_fwd.3} parent=1 // pred_check_branch
      %16 = sbr.rel (0) target = $region9
    $region8: #{residual_downsample_fwd.3} parent=1 // pred_region
      _
    $region9: #{residual_downsample_fwd.3} parent=1 // pred_fallthru
      _
    // Predicated region
    $region10: #{residual_downsample_fwd.3} parent=1 // pred_check
      _
    $region11: #{residual_downsample_fwd.3} parent=1 // pred_check_branch
      %18 = sbr.rel (0) target = $region13
    $region12: #{residual_downsample_fwd.3} parent=1 // pred_region
      _
    $region13: #{residual_downsample_fwd.3} parent=1 // pred_fallthru
      _
    // Predicated region
    $region14: #{residual_downsample_fwd.3} parent=1 // pred_check
      _
    $region15: #{residual_downsample_fwd.3} parent=1 // pred_check_branch
      %20 = sbr.rel (0) target = $region17
    $region16: #{residual_downsample_fwd.3} parent=1 // pred_region
      _
    $region17: #{residual_downsample_fwd.3} parent=1 // pred_fallthru
      _
    // Predicated region
    $region18: #{residual_downsample_fwd.3} parent=1 // pred_check
      _
    $region19: #{residual_downsample_fwd.3} parent=1 // pred_check_branch
      %22 = sbr.rel (0) target = $region21
    $region20: #{residual_downsample_fwd.3} parent=1 // pred_region
      _
    $region21: #{residual_downsample_fwd.3} parent=1 // pred_fallthru
      _
    // Predicated region
    $region22: #{residual_downsample_fwd.3} parent=1 // pred_check
      _
    $region23: #{residual_downsample_fwd.3} parent=1 // pred_check_branch
      %24 = sbr.rel (0) target = $region25
    $region24: #{residual_downsample_fwd.3} parent=1 // pred_region
      _
    $region25: #{residual_downsample_fwd.3} parent=1 // pred_fallthru
      _
    // Predicated region
    $region26: #{residual_downsample_fwd.3} parent=1 // pred_check
      _
    $region27: #{residual_downsample_fwd.3} parent=1 // pred_check_branch
      %26 = sbr.rel (0) target = $region29
    $region28: #{residual_downsample_fwd.3} parent=1 // pred_region
      %s28 = ssub.s32 16, 16
      %29 = vsyncadd [#allocation3], %s28
      %s31 = sshll.u32 %s6, 4
      %s32 = int_to_ptr.vmem [resolvable:$true] %s31
      %34 = dma.vmem_to_smem %s32, 16, [#allocation2], [#allocation3]
    $region29: #{residual_downsample_fwd.3} parent=1 // pred_fallthru
      _
    // Predicated region
    $region30: #{residual_downsample_fwd.3} parent=1 // pred_check
      _
    $region31: #{residual_downsample_fwd.3} parent=1 // pred_check_branch
      %36 = sbr.rel (0) target = $region33
    $region32: #{residual_downsample_fwd.3} parent=1 // pred_region
      %37 = dma.done [#allocation3], 16
    $region33: #{residual_downsample_fwd.3} parent=1 // pred_fallthru
      _
    %38 = sfence
    %v40 = vld [vmem:[%s0] sm:$0xf]
    %v41 = vld [vmem:[%s4] sm:$0xf]
    %v42 = vld [vmem:[%s4 + $0x4] sm:$0xf]
    %v43 = vld [vmem:[%s4 + $0x8] sm:$0xf]
    %v44 = vld [vmem:[%s4 + $0xc] sm:$0xf]
    %v49 = vunpack.c.l.b16 %v41
    %v50 = vunpack.c.l.b16 %v42
    %v51 = vunpack.c.l.b16 %v43
    %v52 = vunpack.c.l.b16 %v44
    %v53 = vpack.c.b16 %v50, %v49
    %v54 = vpack.c.b16 %v52, %v51
    %vm57 = vcmask 261120
    %v59 = vsel %vm57, %v40, 0
    %61 = vmatprep.subr.bf16.mxu0 0
    %62 = vmatpush1.bf16.msra.mxu0 0
    %63 = vmatprep.subr.bf16.mxu0 0
    %64 = vmatpush1.bf16.msra.mxu0 0
    %65 = vmatprep.subr.bf16.mxu0 0
    %66 = vmatpush1.bf16.msra.mxu0 0
    %67 = vmatprep.subr.bf16.mxu0 0
    %68 = vmatpush1.bf16.msra.mxu0 0
    %69 = vmatprep.subr.bf16.mxu0 0
    %70 = vmatpush1.bf16.msra.mxu0 0
    %71 = vmatprep.subr.bf16.mxu0 0
    %72 = vmatpush1.bf16.msra.mxu0 0
    %73 = vmatprep.subr.bf16.mxu0 0
    %74 = vmatpush1.bf16.msra.mxu0 %v54
    %75 = vmatprep.subr.bf16.mxu0 0
    %76 = vmatpush1.bf16.msra.mxu0 %v53
    %77 = vmatprep.subr.bf16.mxu0 0
    %78 = vmatpush2.bf16.msra.mxu0 0
    %79 = vmatprep.subr.bf16.mxu0 0
    %80 = vmatpush2.bf16.msra.mxu0 0
    %81 = vmatprep.subr.bf16.mxu0 0
    %82 = vmatpush2.bf16.msra.mxu0 0
    %83 = vmatprep.subr.bf16.mxu0 0
    %84 = vmatpush2.bf16.msra.mxu0 0
    %85 = vmatprep.subr.bf16.mxu0 0
    %86 = vmatpush2.bf16.msra.mxu0 0
    %87 = vmatprep.subr.bf16.mxu0 0
    %88 = vmatpush2.bf16.msra.mxu0 0
    %89 = vmatprep.subr.bf16.mxu0 0
    %90 = vmatpush2.bf16.msra.mxu0 0
    %91 = vmatprep.subr.bf16.mxu0 0
    %92 = vmatpush2.bf16.msra.mxu0 0
    %93 = vmatprep.mubr.bf16.mxu0 0
    %94 = vmatmul.mubr.bf16.gmra.mxu0 %v59
    %v95 = vpop.f32.mrf.mxu0
    %v96 = vadd.f32 0.0, %v95
    %v97 = vpop.f32.mrf.mxu0
    %v98 = vpop.f32.mrf.mxu0
    %v99 = vpop.f32.mrf.mxu0
    %100 = vdwg.mxu0
    %s101 = sld [smem:[#allocation2]]
    %vm102 = vcmp.ge.f32.partialorder %v96, 0.0
    %v103 = vstv %s101
    %v104 = vmul.f32 %v103, %v96
    %v105 = vsel %vm102, %v96, %v104
    %v106 = vpack.c.bf16 %v105, %v105
    %v107 = vld [vmem:[%s2] sm:$0xf]
    %v108 = vld [vmem:[%s5] sm:$0xf]
    %v109 = vld [vmem:[%s5 + $0x4] sm:$0xf]
    %v110 = vld [vmem:[%s5 + $0x8] sm:$0xf]
    %v111 = vld [vmem:[%s5 + $0xc] sm:$0xf]
    %v116 = vunpack.c.l.b16 %v108
    %v117 = vunpack.c.l.b16 %v109
    %v118 = vunpack.c.l.b16 %v110
    %v119 = vunpack.c.l.b16 %v111
    %v120 = vpack.c.b16 %v117, %v116
    %v121 = vpack.c.b16 %v119, %v118
    %v125 = vsel %vm57, %v107, 0
    %127 = vmatprep.subr.bf16.mxu0 0
    %128 = vmatpush1.bf16.msra.mxu0 0
    %129 = vmatprep.subr.bf16.mxu0 0
    %130 = vmatpush1.bf16.msra.mxu0 0
    %131 = vmatprep.subr.bf16.mxu0 0
    %132 = vmatpush1.bf16.msra.mxu0 0
    %133 = vmatprep.subr.bf16.mxu0 0
    %134 = vmatpush1.bf16.msra.mxu0 0
    %135 = vmatprep.subr.bf16.mxu0 0
    %136 = vmatpush1.bf16.msra.mxu0 0
    %137 = vmatprep.subr.bf16.mxu0 0
    %138 = vmatpush1.bf16.msra.mxu0 0
    %139 = vmatprep.subr.bf16.mxu0 0
    %140 = vmatpush1.bf16.msra.mxu0 %v121
    %141 = vmatprep.subr.bf16.mxu0 0
    %142 = vmatpush1.bf16.msra.mxu0 %v120
    %143 = vmatprep.subr.bf16.mxu0 0
    %144 = vmatpush2.bf16.msra.mxu0 0
    %145 = vmatprep.subr.bf16.mxu0 0
    %146 = vmatpush2.bf16.msra.mxu0 0
    %147 = vmatprep.subr.bf16.mxu0 0
    %148 = vmatpush2.bf16.msra.mxu0 0
    %149 = vmatprep.subr.bf16.mxu0 0
    %150 = vmatpush2.bf16.msra.mxu0 0
    %151 = vmatprep.subr.bf16.mxu0 0
    %152 = vmatpush2.bf16.msra.mxu0 0
    %153 = vmatprep.subr.bf16.mxu0 0
    %154 = vmatpush2.bf16.msra.mxu0 0
    %155 = vmatprep.subr.bf16.mxu0 0
    %156 = vmatpush2.bf16.msra.mxu0 0
    %157 = vmatprep.subr.bf16.mxu0 0
    %158 = vmatpush2.bf16.msra.mxu0 0
    %159 = vmatprep.mubr.bf16.mxu0 0
    %160 = vmatmul.mubr.bf16.gmra.mxu0 %v125
    %v161 = vpop.f32.mrf.mxu0
    %v162 = vadd.f32 0.0, %v161
    %v163 = vpop.f32.mrf.mxu0
    %v164 = vpop.f32.mrf.mxu0
    %v165 = vpop.f32.mrf.mxu0
    %166 = vdwg.mxu0
    %s167 = sld [smem:[#allocation2 + $0x1]]
    %vm168 = vcmp.ge.f32.partialorder %v162, 0.0
    %v169 = vstv %s167
    %v170 = vmul.f32 %v169, %v162
    %v171 = vsel %vm168, %v162, %v170
    %v172 = vpack.c.bf16 %v171, %v171
    %v173 = vld [vmem:[%s1] sm:$0xf]
    %v174 = vld [vmem:[%s1 + $0x4] sm:$0xf]
    %v175 = vld [vmem:[%s3] sm:$0xf]
    %v176 = vld [vmem:[%s3 + $0x4] sm:$0xf]
    %v179 = vunpack.c.l.b16 %v175
    %v180 = vunpack.c.l.b16 %v176
    %v181 = vpack.c.b16 %v180, %v179
    %vm182 = vcmask 64512
    %v184 = vsel %vm182, %v181, 0
    %vm186 = vcmask 1043456
    %v188 = vsel %vm186, %v172, 0
    %190 = vmatprep.subr.bf16.mxu0 0
    %191 = vmatpush1.bf16.msra.mxu0 0
    %192 = vmatprep.subr.bf16.mxu0 0
    %193 = vmatpush1.bf16.msra.mxu0 0
    %194 = vmatprep.subr.bf16.mxu0 0
    %195 = vmatpush1.bf16.msra.mxu0 0
    %196 = vmatprep.subr.bf16.mxu0 0
    %197 = vmatpush1.bf16.msra.mxu0 0
    %198 = vmatprep.subr.bf16.mxu0 0
    %199 = vmatpush1.bf16.msra.mxu0 0
    %200 = vmatprep.subr.bf16.mxu0 0
    %201 = vmatpush1.bf16.msra.mxu0 0
    %202 = vmatprep.subr.bf16.mxu0 0
    %203 = vmatpush1.bf16.msra.mxu0 0
    %204 = vmatprep.subr.bf16.mxu0 0
    %205 = vmatpush1.bf16.msra.mxu0 %v188
    %206 = vmatprep.subr.bf16.mxu0 0
    %207 = vmatpush2.bf16.msra.mxu0 0
    %208 = vmatprep.subr.bf16.mxu0 0
    %209 = vmatpush2.bf16.msra.mxu0 0
    %210 = vmatprep.subr.bf16.mxu0 0
    %211 = vmatpush2.bf16.msra.mxu0 0
    %212 = vmatprep.subr.bf16.mxu0 0
    %213 = vmatpush2.bf16.msra.mxu0 0
    %214 = vmatprep.subr.bf16.mxu0 0
    %215 = vmatpush2.bf16.msra.mxu0 0
    %216 = vmatprep.subr.bf16.mxu0 0
    %217 = vmatpush2.bf16.msra.mxu0 0
    %218 = vmatprep.subr.bf16.mxu0 0
    %219 = vmatpush2.bf16.msra.mxu0 0
    %220 = vmatprep.subr.bf16.mxu0 0
    %221 = vmatpush2.bf16.msra.mxu0 0
    %222 = vmatprep.mubr.bf16.mxu0 0
    %223 = vmatmul.mubr.bf16.gmra.mxu0 %v184
    %v224 = vpop.f32.mrf.mxu0
    %v225 = vadd.f32 0.0, %v224
    %v226 = vpop.f32.mrf.mxu0
    %v227 = vpop.f32.mrf.mxu0
    %v228 = vadd.f32 0.0, %v227
    %v229 = vpop.f32.mrf.mxu0
    %230 = vdwg.mxu0
    %v233 = vunpack.c.l.b16 %v173
    %v234 = vunpack.c.l.b16 %v174
    %v235 = vpack.c.b16 %v234, %v233
    %v237 = vsel %vm182, %v235, 0
    %v240 = vsel %vm186, %v106, 0
    %242 = vmatprep.subr.bf16.mxu0 0
    %243 = vmatpush1.bf16.msra.mxu0 0
    %244 = vmatprep.subr.bf16.mxu0 0
    %245 = vmatpush1.bf16.msra.mxu0 0
    %246 = vmatprep.subr.bf16.mxu0 0
    %247 = vmatpush1.bf16.msra.mxu0 0
    %248 = vmatprep.subr.bf16.mxu0 0
    %249 = vmatpush1.bf16.msra.mxu0 0
    %250 = vmatprep.subr.bf16.mxu0 0
    %251 = vmatpush1.bf16.msra.mxu0 0
    %252 = vmatprep.subr.bf16.mxu0 0
    %253 = vmatpush1.bf16.msra.mxu0 0
    %254 = vmatprep.subr.bf16.mxu0 0
    %255 = vmatpush1.bf16.msra.mxu0 0
    %256 = vmatprep.subr.bf16.mxu0 0
    %257 = vmatpush1.bf16.msra.mxu0 %v240
    %258 = vmatprep.subr.bf16.mxu0 0
    %259 = vmatpush2.bf16.msra.mxu0 0
    %260 = vmatprep.subr.bf16.mxu0 0
    %261 = vmatpush2.bf16.msra.mxu0 0
    %262 = vmatprep.subr.bf16.mxu0 0
    %263 = vmatpush2.bf16.msra.mxu0 0
    %264 = vmatprep.subr.bf16.mxu0 0
    %265 = vmatpush2.bf16.msra.mxu0 0
    %266 = vmatprep.subr.bf16.mxu0 0
    %267 = vmatpush2.bf16.msra.mxu0 0
    %268 = vmatprep.subr.bf16.mxu0 0
    %269 = vmatpush2.bf16.msra.mxu0 0
    %270 = vmatprep.subr.bf16.mxu0 0
    %271 = vmatpush2.bf16.msra.mxu0 0
    %272 = vmatprep.subr.bf16.mxu0 0
    %273 = vmatpush2.bf16.msra.mxu0 0
    %274 = vmatprep.mubr.bf16.mxu0 0
    %275 = vmatmul.mubr.bf16.gmra.mxu0 %v237
    %v276 = vpop.f32.mrf.mxu0
    %v277 = vadd.f32 %v225, %v276
    %v278 = vpop.f32.mrf.mxu0
    %v279 = vpop.f32.mrf.mxu0
    %v280 = vadd.f32 %v228, %v279
    %v281 = vpop.f32.mrf.mxu0
    %282 = vdwg.mxu0
    %283 = vst [vmem:[%s7] sm:$0xff] %v277
    %284 = vst [vmem:[%s7 + $0x8] sm:$0xff] %v280
    // Predicated region
    $region34: #{residual_downsample_fwd.3} parent=1 // pred_check
      _
    $region35: #{residual_downsample_fwd.3} parent=1 // pred_check_branch
      %286 = sbr.rel (0) target = $region37
    $region36: #{residual_downsample_fwd.3} parent=1 // pred_region
      _
    $region37: #{residual_downsample_fwd.3} parent=1 // pred_fallthru
      _
    // Predicated region
    $region38: #{residual_downsample_fwd.3} parent=1 // pred_check
      _
    $region39: #{residual_downsample_fwd.3} parent=1 // pred_check_branch
      %288 = sbr.rel (0) target = $region41
    $region40: #{residual_downsample_fwd.3} parent=1 // pred_region
      _
    $region41: #{residual_downsample_fwd.3} parent=1 // pred_fallthru
      _
    %289 = vsyncpa [#allocation3], 1

</llo_original>
